<compile_context>
chip_gen: v6e
topology: v6e:2x2x1
jax: 0.10.0
libtpu: 0.0.40
codegen_flags: <defaults>
</compile_context>

<pallas_src>
import functools
import math

import jax
import jax.numpy as jnp
import numpy as np
from jax.experimental import pallas as pl
from jax.experimental.pallas import tpu as pltpu  # noqa: F401  (TPU backend)

_MXU_DTYPE = jnp.bfloat16   # MXU operand dtype (bf16 on v5e/v6e/v7x); accumulation stays f32
_BN_EPS = 1e-5

# kernel tap kh/kw -> (polyphase parity, shift on the polyphase/output grid) for stride-2 conv
_S2_TAP = {0: (1, -1), 1: (0, 0), 2: (1, 0)}


# ----------------------------------------------------------------------------
# In-kernel helpers (all activations are channel-major flat: (C, N*H*W) f32)
# ----------------------------------------------------------------------------
def _bn_relu(chunks, gamma, beta):
    """Training-mode BatchNorm2d + ReLU over chunks that share batch statistics.

    chunks : list of (C, M_k) f32 arrays that together hold the full (N, H, W) batch.
    gamma, beta : (C, 1) f32.
    One-pass (sum, sum-of-squares) biased-variance batch stats, eps=1e-5; all f32 (VPU).
    """
    cnt = float(sum(c.shape[1] for c in chunks))
    s = sum(jnp.sum(c, axis=1, keepdims=True) for c in chunks)
    sq = sum(jnp.sum(c * c, axis=1, keepdims=True) for c in chunks)
    mean = s / cnt
    var = jnp.maximum(sq / cnt - mean * mean, 0.0)
    scale = jax.lax.rsqrt(var + _BN_EPS) * gamma
    shift = beta - mean * scale
    return [jnp.maximum(c * scale + shift, 0.0) for c in chunks]


def _mask(masks, dh, dw):
    k = (dh + 1) * 3 + (dw + 1)
    return masks[k:k + 1, :]                                     # (1, M)


def _shift(x, delta, mask):
    """out[:, f] = x[:, f + delta] where the shifted spatial position is valid, else 0.

    `delta` is a static flat-index offset; `mask` is the matching (1, M) 0/1 validity mask.
    Implemented with slice + lane-axis concat (no strided slicing inside the kernel).
    """
    c, m = x.shape
    if delta > 0:
        sh = jnp.concatenate([x[:, delta:], jnp.zeros((c, delta), x.dtype)], axis=1)
    elif delta < 0:
        sh = jnp.concatenate([jnp.zeros((c, -delta), x.dtype), x[:, :m + delta]], axis=1)
    else:
        sh = x
    return sh * mask


def _conv3x3_s1(h, w_mat, masks, wg):
    """3x3 / stride-1 / pad-1 conv as ONE im2col MXU matmul.

    h: (Cin, M) f32, w_mat: (Cout, 9*Cin) bf16, masks: (9, M), wg: grid width.
    """
    rows = []
    for kh in range(3):
        for kw in range(3):
            dh, dw = kh - 1, kw - 1
            rows.append(_shift(h, dh * wg + dw, _mask(masks, dh, dw)))
    patches = jnp.concatenate(rows, axis=0)                      # (9*Cin, M)
    return jnp.dot(w_mat, patches.astype(w_mat.dtype),
                   preferred_element_type=jnp.float32)           # (Cout, M) f32


def _conv3x3_s2(hpp, w_mat, masks, wg):
    """3x3 / stride-2 / pad-1 conv as ONE im2col MXU matmul on the polyphase input.

    hpp[p][q]: (Cin, Mo) f32 = activation at rows 2a+p, cols 2b+q (output-grid flattened).
    """
    rows = []
    for kh in range(3):
        ph, dh = _S2_TAP[kh]
        for kw in range(3):
            pw, dw = _S2_TAP[kw]
            rows.append(_shift(hpp[ph][pw], dh * wg + dw, _mask(masks, dh, dw)))
    patches = jnp.concatenate(rows, axis=0)                      # (9*Cin, Mo)
    return jnp.dot(w_mat, patches.astype(w_mat.dtype),
                   preferred_element_type=jnp.float32)           # (Cout, Mo) f32


def _basic_rp_block(inp, g1, b1, w1m, g2, b2, w2m, wsm, masks, *, stride, wo):
    """One BasicRPBlock computed entirely on VMEM-resident values."""
    if stride == 1:
        x = inp                                                  # (Cin, M)
        h = _bn_relu([x], g1, b1)[0]
        out = _conv3x3_s1(h, w1m, masks, wo)
        short_in, identity = h, x
    else:                                                        # stride 2 (first layer only)
        comps = [inp[0][0], inp[0][1], inp[1][0], inp[1][1]]
        hh = _bn_relu(comps, g1, b1)                             # shared batch statistics
        hpp = [[hh[0], hh[1]], [hh[2], hh[3]]]
        out = _conv3x3_s2(hpp, w1m, masks, wo)
        short_in, identity = hpp[0][0], None
    out = _bn_relu([out], g2, b2)[0]
    out = _conv3x3_s1(out, w2m, masks, wo)
    if wsm is not None:                                          # 1x1 strided shortcut conv
        res = jnp.dot(wsm, short_in.astype(wsm.dtype),
                      preferred_element_type=jnp.float32)
    else:                                                        # identity shortcut
        res = identity
    return res + out                                             # residual add fused here


# ----------------------------------------------------------------------------
# Fused kernel + wrapper
# ----------------------------------------------------------------------------
def _network_block_kernel(*refs, layers, n_in0, n_masks):
    """Whole NetworkBlock (all BasicRPBlock layers) fused into one kernel launch.

    refs = [first-layer input(s)] + [mask bundles] + [per-layer params] + [out ref].
    layers: static tuple of (stride, has_shortcut, mask_idx, output_grid_width).
    """
    o_ref = refs[-1]
    refs = refs[:-1]
    in0 = refs[:n_in0]
    masks = [refs[n_in0 + k][...] for k in range(n_masks)]
    pos = n_in0 + n_masks

    y = None
    for li, (stride, has_short, mask_idx, wo) in enumerate(layers):
        if li == 0:
            if stride == 1:
                inp = in0[0][...].astype(jnp.float32)
            else:
                c = [r[...].astype(jnp.float32) for r in in0]
                inp = [[c[0], c[1]], [c[2], c[3]]]
        else:
            inp = y
        g1, b1, w1m = refs[pos][...], refs[pos + 1][...], refs[pos + 2][...]
        g2, b2, w2m = refs[pos + 3][...], refs[pos + 4][...], refs[pos + 5][...]
        pos += 6
        wsm = None
        if has_short:
            wsm = refs[pos][...]
            pos += 1
        y = _basic_rp_block(inp, g1, b1, w1m, g2, b2, w2m, wsm, masks[mask_idx],
                            stride=stride, wo=wo)
    o_ref[...] = y.astype(o_ref.dtype)


def _w3x3_to_mat(w_oihw):
    """OIHW (Cout, Cin, 3, 3) -> (Cout, 9*Cin), row order (kh, kw, cin) to match im2col."""
    cout, cin, kh, kw = w_oihw.shape
    return jnp.transpose(w_oihw, (0, 2, 3, 1)).reshape(cout, kh * kw * cin).astype(_MXU_DTYPE)


def _make_shift_masks(n, hs, ws):
    """(9, n*hs*ws) f32 validity masks for shifts (dh, dw) in {-1,0,1}^2 on an (n,hs,ws) grid."""
    f = np.arange(n * hs * ws)
    i = (f // ws) % hs
    j = f % ws
    rows = []
    for dh in (-1, 0, 1):
        for dw in (-1, 0, 1):
            rows.append(((i + dh >= 0) & (i + dh < hs) &
                         (j + dw >= 0) & (j + dw < ws)).astype(np.float32))
    return jnp.asarray(np.stack(rows, axis=0))


def network_block_forward(x_nchw, params, strides):
    """NetworkBlock forward pass.  NCHW in / NCHW out (PyTorch layout); one pallas_call."""
    N, c0, H, W = x_nchw.shape
    if strides[0] not in (1, 2) or any(s != 1 for s in strides[1:]):
        # TODO(synk): general strides beyond WideResNet's (first-layer 1 or 2) not implemented.
        raise NotImplementedError("only stride in {1, 2} on the first layer is supported")

    # ---- first-layer input in channel-major flat (lane-dense) layout ----
    x_cf = jnp.transpose(x_nchw, (1, 0, 2, 3))                   # (C, N, H, W)
    inputs = []
    if strides[0] == 2:
        assert H % 2 == 0 and W % 2 == 0
        hh, ww = H // 2, W // 2
        for p_ in range(2):                                      # polyphase split:
            for q_ in range(2):                                  # rows 2a+p_, cols 2b+q_
                inputs.append(x_cf[:, :, p_::2, q_::2].reshape(c0, N * hh * ww))
        n_in0 = 4
    else:
        inputs.append(x_cf.reshape(c0, N * H * W))
        n_in0 = 1

    # ---- static shift-validity masks (one bundle per distinct output grid) + params ----
    mask_arrays, grid_to_idx = [], {}
    layer_meta, param_inputs = [], []
    h_sp, w_sp = H, W
    for p, s in zip(params, strides):
        ho, wo = (h_sp - 1) // s + 1, (w_sp - 1) // s + 1
        grid = (N, ho, wo)
        if grid not in grid_to_idx:
            grid_to_idx[grid] = len(mask_arrays)
            mask_arrays.append(_make_shift_masks(*grid))
        cout, cin = p["w1"].shape[0], p["w1"].shape[1]
        has_short = "w_short" in p
        layer_meta.append((s, has_short, grid_to_idx[grid], wo))
        param_inputs += [
            p["gamma1"].reshape(cin, 1).astype(jnp.float32),
            p["beta1"].reshape(cin, 1).astype(jnp.float32),
            _w3x3_to_mat(p["w1"]),
            p["gamma2"].reshape(cout, 1).astype(jnp.float32),
            p["beta2"].reshape(cout, 1).astype(jnp.float32),
            _w3x3_to_mat(p["w2"]),
        ]
        if has_short:
            param_inputs.append(p["w_short"].reshape(cout, cin).astype(_MXU_DTYPE))
        h_sp, w_sp = ho, wo

    inputs += mask_arrays + param_inputs
    cout_last = params[-1]["w2"].shape[0]

    out_flat = pl.pallas_call(
        functools.partial(_network_block_kernel, layers=tuple(layer_meta),
                          n_in0=n_in0, n_masks=len(mask_arrays)),
        out_shape=jax.ShapeDtypeStruct((cout_last, N * h_sp * w_sp), jnp.float32),
        # No grid / BlockSpecs: the whole (tiny) batch lives in VMEM for a single launch.
        # This is also required for exact semantics: training-mode BN couples the full batch.
    )(*inputs)

    y = out_flat.reshape(cout_last, N, h_sp, w_sp)
    return jnp.transpose(y, (1, 0, 2, 3))                        # back to NCHW


# ----------------------------------------------------------------------------
# Parameter init (deterministic, synthetic; weights stored PyTorch-style OIHW)
# ----------------------------------------------------------------------------
def _conv_weight(key, cout, cin, k):
    scale = 1.0 / math.sqrt(k * k * cin)
    return jax.random.normal(key, (cout, cin, k, k), jnp.float32) * scale


def init_basic_rp_block(key, in_planes, out_planes, rp_out_channel):
    ks = jax.random.split(key, 9)
    p = {
        # Non-trivial affine params so the BN scale/shift path is actually exercised.
        "gamma1": 1.0 + 0.1 * jax.random.normal(ks[0], (in_planes,), jnp.float32),
        "beta1": 0.1 * jax.random.normal(ks[1], (in_planes,), jnp.float32),
        # rp_conv1 / rp1 outputs are channel-concatenated -> fold into one conv whose
        # output channels are the concatenation of both weight tensors (exactly equivalent).
        "w1": jnp.concatenate(
            [_conv_weight(ks[2], out_planes - rp_out_channel, in_planes, 3),
             _conv_weight(ks[3], rp_out_channel, in_planes, 3)], axis=0),
        "gamma2": 1.0 + 0.1 * jax.random.normal(ks[4], (out_planes,), jnp.float32),
        "beta2": 0.1 * jax.random.normal(ks[5], (out_planes,), jnp.float32),
        "w2": jnp.concatenate(
            [_conv_weight(ks[6], out_planes - rp_out_channel, out_planes, 3),
             _conv_weight(ks[7], rp_out_channel, out_planes, 3)], axis=0),
    }
    if in_planes != out_planes:
        p["w_short"] = _conv_weight(ks[8], out_planes, in_planes, 1)
    return p


def init_network_block(key, nb_layers, in_planes, out_planes, stride, rp_out_channel):
    keys = jax.random.split(key, nb_layers)
    params, strides = [], []
    for i in range(nb_layers):
        cin = in_planes if i == 0 else out_planes
        s = stride if i == 0 else 1
        params.append(init_basic_rp_block(keys[i], cin, out_planes, rp_out_channel))
        strides.append(s)
    return params, strides


# ----------------------------------------------------------------------------
# Pure-JAX reference (NCHW, PyTorch semantics; convs mirror the kernel's MXU precision)
# ----------------------------------------------------------------------------
def _ref_bn_relu(x, gamma, beta):
    mean = x.mean(axis=(0, 2, 3), keepdims=True)
    var = jnp.mean(jnp.square(x - mean), axis=(0, 2, 3), keepdims=True)   # biased variance
    y = (x - mean) * jax.lax.rsqrt(var + _BN_EPS)
    return jnp.maximum(y * gamma.reshape(1, -1, 1, 1) + beta.reshape(1, -1, 1, 1), 0.0)


def _ref_conv(x, w, stride, pad):
    # bf16 operands + f32 accumulation, mirroring the kernel's MXU precision.
    return jax.lax.conv_general_dilated(
        x.astype(_MXU_DTYPE), w.astype(_MXU_DTYPE), (stride, stride),
        [(pad, pad), (pad, pad)],
        dimension_numbers=("NCHW", "OIHW", "NCHW"),
        preferred_element_type=jnp.float32)


def _ref_block(x, p, stride):
    equal_in_out = "w_short" not in p
    h = _ref_bn_relu(x, p["gamma1"], p["beta1"])
    out = _ref_conv(h, p["w1"], stride, 1)
    out = _ref_bn_relu(out, p["gamma2"], p["beta2"])
    out = _ref_conv(out, p["w2"], 1, 1)
    res = x if equal_in_out else _ref_conv(h, p["w_short"], stride, 0)
    return res + out


def _ref_network_block(x, params, strides):
    for p, s in zip(params, strides):
        x = _ref_block(x, p, s)
    return x


# ----------------------------------------------------------------------------
if __name__ == "__main__":
    # NetworkBlock(nb_layers=2, in_planes=4, out_planes=8, block=BasicRPBlock,
    #              stride=2, dropRate=0.0, rp=True, rp_out_channel=2)
    NB_LAYERS, IN_PLANES, OUT_PLANES, STRIDE, RP_OUT = 2, 4, 8, 2, 2
    N, H, W = 2, 16, 16

    key = jax.random.PRNGKey(0)
    k_x, k_p = jax.random.split(key)

    x = jax.random.normal(k_x, (N, IN_PLANES, H, W), jnp.float32)     # NCHW (PyTorch layout)
    params, strides = init_network_block(k_p, NB_LAYERS, IN_PLANES, OUT_PLANES, STRIDE, RP_OUT)

    fwd = jax.jit(lambda xx: network_block_forward(xx, params, strides))
    y = jax.block_until_ready(fwd(x))
    assert y.shape == (N, OUT_PLANES, H // STRIDE, W // STRIDE), y.shape

    y_ref = _ref_network_block(x, params, strides)
    # Tolerance covers bf16 MXU-operand quantization boundary effects; a real bug
    # (wrong tap order / stride / BN stats) would be off by O(0.1-1).
    np.testing.assert_allclose(np.asarray(y), np.asarray(y_ref), rtol=2e-2, atol=2e-2)

    print("KERNEL_OK")
</pallas_src>

<mosaic_0001>
module attributes {stable_mosaic.version = 11 : i64} {
  func.func @_network_block_kernel(%arg0: memref<4x128xf32, #tpu.memory_space<vmem>>, %arg1: memref<4x128xf32, #tpu.memory_space<vmem>>, %arg2: memref<4x128xf32, #tpu.memory_space<vmem>>, %arg3: memref<4x128xf32, #tpu.memory_space<vmem>>, %arg4: memref<9x128xf32, #tpu.memory_space<vmem>>, %arg5: memref<4x1xf32, #tpu.memory_space<vmem>>, %arg6: memref<4x1xf32, #tpu.memory_space<vmem>>, %arg7: memref<8x36xbf16, #tpu.memory_space<vmem>>, %arg8: memref<8x1xf32, #tpu.memory_space<vmem>>, %arg9: memref<8x1xf32, #tpu.memory_space<vmem>>, %arg10: memref<8x72xbf16, #tpu.memory_space<vmem>>, %arg11: memref<8x4xbf16, #tpu.memory_space<vmem>>, %arg12: memref<8x1xf32, #tpu.memory_space<vmem>>, %arg13: memref<8x1xf32, #tpu.memory_space<vmem>>, %arg14: memref<8x72xbf16, #tpu.memory_space<vmem>>, %arg15: memref<8x1xf32, #tpu.memory_space<vmem>>, %arg16: memref<8x1xf32, #tpu.memory_space<vmem>>, %arg17: memref<8x72xbf16, #tpu.memory_space<vmem>>, %arg18: memref<8x128xf32, #tpu.memory_space<vmem>>) attributes {dimension_semantics = [], scalar_prefetch = 0 : i64, scratch_operands = 0 : i64, tpu.core_type = #tpu.core_type<tc>} {
    %c0 = arith.constant 0 : index
    %c0_0 = arith.constant 0 : index
    %0 = vector.load %arg4[%c0, %c0_0] : memref<9x128xf32, #tpu.memory_space<vmem>>, vector<9x128xf32>
    %c0_1 = arith.constant 0 : index
    %c0_2 = arith.constant 0 : index
    %1 = vector.load %arg0[%c0_1, %c0_2] : memref<4x128xf32, #tpu.memory_space<vmem>>, vector<4x128xf32>
    %c0_3 = arith.constant 0 : index
    %c0_4 = arith.constant 0 : index
    %2 = vector.load %arg1[%c0_3, %c0_4] : memref<4x128xf32, #tpu.memory_space<vmem>>, vector<4x128xf32>
    %c0_5 = arith.constant 0 : index
    %c0_6 = arith.constant 0 : index
    %3 = vector.load %arg2[%c0_5, %c0_6] : memref<4x128xf32, #tpu.memory_space<vmem>>, vector<4x128xf32>
    %c0_7 = arith.constant 0 : index
    %c0_8 = arith.constant 0 : index
    %4 = vector.load %arg3[%c0_7, %c0_8] : memref<4x128xf32, #tpu.memory_space<vmem>>, vector<4x128xf32>
    %c0_9 = arith.constant 0 : index
    %c0_10 = arith.constant 0 : index
    %5 = vector.load %arg5[%c0_9, %c0_10] : memref<4x1xf32, #tpu.memory_space<vmem>>, vector<4x1xf32>
    %c0_11 = arith.constant 0 : index
    %c0_12 = arith.constant 0 : index
    %6 = vector.load %arg6[%c0_11, %c0_12] : memref<4x1xf32, #tpu.memory_space<vmem>>, vector<4x1xf32>
    %c0_13 = arith.constant 0 : index
    %c0_14 = arith.constant 0 : index
    %7 = vector.load %arg7[%c0_13, %c0_14] : memref<8x36xbf16, #tpu.memory_space<vmem>>, vector<8x36xbf16>
    %c0_15 = arith.constant 0 : index
    %c0_16 = arith.constant 0 : index
    %8 = vector.load %arg8[%c0_15, %c0_16] : memref<8x1xf32, #tpu.memory_space<vmem>>, vector<8x1xf32>
    %c0_17 = arith.constant 0 : index
    %c0_18 = arith.constant 0 : index
    %9 = vector.load %arg9[%c0_17, %c0_18] : memref<8x1xf32, #tpu.memory_space<vmem>>, vector<8x1xf32>
    %c0_19 = arith.constant 0 : index
    %c0_20 = arith.constant 0 : index
    %10 = vector.load %arg10[%c0_19, %c0_20] : memref<8x72xbf16, #tpu.memory_space<vmem>>, vector<8x72xbf16>
    %c0_21 = arith.constant 0 : index
    %c0_22 = arith.constant 0 : index
    %11 = vector.load %arg11[%c0_21, %c0_22] : memref<8x4xbf16, #tpu.memory_space<vmem>>, vector<8x4xbf16>
    %cst = arith.constant dense<0.000000e+00> : vector<4xf32>
    %12 = vector.multi_reduction <add>, %1, %cst [1] : vector<4x128xf32> to vector<4xf32>
    %13 = vector.shape_cast %12 : vector<4xf32> to vector<4x1xf32>
    %cst_23 = arith.constant 0.000000e+00 : f32
    %14 = vector.broadcast %cst_23 : f32 to vector<4x1xf32>
    %15 = arith.addf %14, %13 : vector<4x1xf32>
    %cst_24 = arith.constant dense<0.000000e+00> : vector<4xf32>
    %16 = vector.multi_reduction <add>, %2, %cst_24 [1] : vector<4x128xf32> to vector<4xf32>
    %17 = vector.shape_cast %16 : vector<4xf32> to vector<4x1xf32>
    %18 = arith.addf %15, %17 : vector<4x1xf32>
    %cst_25 = arith.constant dense<0.000000e+00> : vector<4xf32>
    %19 = vector.multi_reduction <add>, %3, %cst_25 [1] : vector<4x128xf32> to vector<4xf32>
    %20 = vector.shape_cast %19 : vector<4xf32> to vector<4x1xf32>
    %21 = arith.addf %18, %20 : vector<4x1xf32>
    %cst_26 = arith.constant dense<0.000000e+00> : vector<4xf32>
    %22 = vector.multi_reduction <add>, %4, %cst_26 [1] : vector<4x128xf32> to vector<4xf32>
    %23 = vector.shape_cast %22 : vector<4xf32> to vector<4x1xf32>
    %24 = arith.addf %21, %23 : vector<4x1xf32>
    %25 = arith.mulf %1, %1 : vector<4x128xf32>
    %cst_27 = arith.constant dense<0.000000e+00> : vector<4xf32>
    %26 = vector.multi_reduction <add>, %25, %cst_27 [1] : vector<4x128xf32> to vector<4xf32>
    %27 = vector.shape_cast %26 : vector<4xf32> to vector<4x1xf32>
    %cst_28 = arith.constant 0.000000e+00 : f32
    %28 = vector.broadcast %cst_28 : f32 to vector<4x1xf32>
    %29 = arith.addf %28, %27 : vector<4x1xf32>
    %30 = arith.mulf %2, %2 : vector<4x128xf32>
    %cst_29 = arith.constant dense<0.000000e+00> : vector<4xf32>
    %31 = vector.multi_reduction <add>, %30, %cst_29 [1] : vector<4x128xf32> to vector<4xf32>
    %32 = vector.shape_cast %31 : vector<4xf32> to vector<4x1xf32>
    %33 = arith.addf %29, %32 : vector<4x1xf32>
    %34 = arith.mulf %3, %3 : vector<4x128xf32>
    %cst_30 = arith.constant dense<0.000000e+00> : vector<4xf32>
    %35 = vector.multi_reduction <add>, %34, %cst_30 [1] : vector<4x128xf32> to vector<4xf32>
    %36 = vector.shape_cast %35 : vector<4xf32> to vector<4x1xf32>
    %37 = arith.addf %33, %36 : vector<4x1xf32>
    %38 = arith.mulf %4, %4 : vector<4x128xf32>
    %cst_31 = arith.constant dense<0.000000e+00> : vector<4xf32>
    %39 = vector.multi_reduction <add>, %38, %cst_31 [1] : vector<4x128xf32> to vector<4xf32>
    %40 = vector.shape_cast %39 : vector<4xf32> to vector<4x1xf32>
    %41 = arith.addf %37, %40 : vector<4x1xf32>
    %cst_32 = arith.constant 5.120000e+02 : f32
    %42 = vector.broadcast %cst_32 : f32 to vector<4x1xf32>
    %43 = arith.divf %24, %42 : vector<4x1xf32>
    %cst_33 = arith.constant 5.120000e+02 : f32
    %44 = vector.broadcast %cst_33 : f32 to vector<4x1xf32>
    %45 = arith.divf %41, %44 : vector<4x1xf32>
    %46 = arith.mulf %43, %43 : vector<4x1xf32>
    %47 = arith.subf %45, %46 : vector<4x1xf32>
    %cst_34 = arith.constant 0.000000e+00 : f32
    %48 = vector.broadcast %cst_34 : f32 to vector<4x1xf32>
    %49 = arith.maximumf %47, %48 : vector<4x1xf32>
    %cst_35 = arith.constant 9.99999974E-6 : f32
    %50 = vector.broadcast %cst_35 : f32 to vector<4x1xf32>
    %51 = arith.addf %49, %50 : vector<4x1xf32>
    %52 = math.rsqrt %51 : vector<4x1xf32>
    %53 = arith.mulf %52, %5 : vector<4x1xf32>
    %54 = arith.mulf %43, %53 : vector<4x1xf32>
    %55 = arith.subf %6, %54 : vector<4x1xf32>
    %56 = vector.broadcast %53 : vector<4x1xf32> to vector<4x128xf32>
    %57 = arith.mulf %1, %56 : vector<4x128xf32>
    %58 = vector.broadcast %55 : vector<4x1xf32> to vector<4x128xf32>
    %59 = arith.addf %57, %58 : vector<4x128xf32>
    %cst_36 = arith.constant 0.000000e+00 : f32
    %60 = vector.broadcast %cst_36 : f32 to vector<4x128xf32>
    %61 = arith.maximumf %59, %60 : vector<4x128xf32>
    %62 = vector.broadcast %53 : vector<4x1xf32> to vector<4x128xf32>
    %63 = arith.mulf %2, %62 : vector<4x128xf32>
    %64 = vector.broadcast %55 : vector<4x1xf32> to vector<4x128xf32>
    %65 = arith.addf %63, %64 : vector<4x128xf32>
    %cst_37 = arith.constant 0.000000e+00 : f32
    %66 = vector.broadcast %cst_37 : f32 to vector<4x128xf32>
    %67 = arith.maximumf %65, %66 : vector<4x128xf32>
    %68 = vector.broadcast %53 : vector<4x1xf32> to vector<4x128xf32>
    %69 = arith.mulf %3, %68 : vector<4x128xf32>
    %70 = vector.broadcast %55 : vector<4x1xf32> to vector<4x128xf32>
    %71 = arith.addf %69, %70 : vector<4x128xf32>
    %cst_38 = arith.constant 0.000000e+00 : f32
    %72 = vector.broadcast %cst_38 : f32 to vector<4x128xf32>
    %73 = arith.maximumf %71, %72 : vector<4x128xf32>
    %74 = vector.broadcast %53 : vector<4x1xf32> to vector<4x128xf32>
    %75 = arith.mulf %4, %74 : vector<4x128xf32>
    %76 = vector.broadcast %55 : vector<4x1xf32> to vector<4x128xf32>
    %77 = arith.addf %75, %76 : vector<4x128xf32>
    %cst_39 = arith.constant 0.000000e+00 : f32
    %78 = vector.broadcast %cst_39 : f32 to vector<4x128xf32>
    %79 = arith.maximumf %77, %78 : vector<4x128xf32>
    %80 = vector.extract_strided_slice %0 {offsets = [0, 0], sizes = [1, 128], strides = [1, 1]} : vector<9x128xf32> to vector<1x128xf32>
    %cst_40 = arith.constant 0.000000e+00 : f32
    %81 = vector.broadcast %cst_40 : f32 to vector<4x9xf32>
    %82 = vector.extract_strided_slice %79 {offsets = [0, 0], sizes = [4, 119], strides = [1, 1]} : vector<4x128xf32> to vector<4x119xf32>
    %83 = tpu.concatenate %81, %82 in 1 : vector<4x9xf32>, vector<4x119xf32> -> vector<4x128xf32>
    %84 = vector.broadcast %80 : vector<1x128xf32> to vector<4x128xf32>
    %85 = arith.mulf %83, %84 : vector<4x128xf32>
    %86 = vector.extract_strided_slice %0 {offsets = [1, 0], sizes = [1, 128], strides = [1, 1]} : vector<9x128xf32> to vector<1x128xf32>
    %cst_41 = arith.constant 0.000000e+00 : f32
    %87 = vector.broadcast %cst_41 : f32 to vector<4x8xf32>
    %88 = vector.extract_strided_slice %73 {offsets = [0, 0], sizes = [4, 120], strides = [1, 1]} : vector<4x128xf32> to vector<4x120xf32>
    %89 = tpu.concatenate %87, %88 in 1 : vector<4x8xf32>, vector<4x120xf32> -> vector<4x128xf32>
    %90 = vector.broadcast %86 : vector<1x128xf32> to vector<4x128xf32>
    %91 = arith.mulf %89, %90 : vector<4x128xf32>
    %92 = vector.extract_strided_slice %0 {offsets = [1, 0], sizes = [1, 128], strides = [1, 1]} : vector<9x128xf32> to vector<1x128xf32>
    %cst_42 = arith.constant 0.000000e+00 : f32
    %93 = vector.broadcast %cst_42 : f32 to vector<4x8xf32>
    %94 = vector.extract_strided_slice %79 {offsets = [0, 0], sizes = [4, 120], strides = [1, 1]} : vector<4x128xf32> to vector<4x120xf32>
    %95 = tpu.concatenate %93, %94 in 1 : vector<4x8xf32>, vector<4x120xf32> -> vector<4x128xf32>
    %96 = vector.broadcast %92 : vector<1x128xf32> to vector<4x128xf32>
    %97 = arith.mulf %95, %96 : vector<4x128xf32>
    %98 = vector.extract_strided_slice %0 {offsets = [3, 0], sizes = [1, 128], strides = [1, 1]} : vector<9x128xf32> to vector<1x128xf32>
    %cst_43 = arith.constant 0.000000e+00 : f32
    %99 = vector.broadcast %cst_43 : f32 to vector<4x1xf32>
    %100 = vector.extract_strided_slice %67 {offsets = [0, 0], sizes = [4, 127], strides = [1, 1]} : vector<4x128xf32> to vector<4x127xf32>
    %101 = tpu.concatenate %99, %100 in 1 : vector<4x1xf32>, vector<4x127xf32> -> vector<4x128xf32>
    %102 = vector.broadcast %98 : vector<1x128xf32> to vector<4x128xf32>
    %103 = arith.mulf %101, %102 : vector<4x128xf32>
    %104 = vector.extract_strided_slice %0 {offsets = [4, 0], sizes = [1, 128], strides = [1, 1]} : vector<9x128xf32> to vector<1x128xf32>
    %105 = vector.broadcast %104 : vector<1x128xf32> to vector<4x128xf32>
    %106 = arith.mulf %61, %105 : vector<4x128xf32>
    %107 = vector.extract_strided_slice %0 {offsets = [4, 0], sizes = [1, 128], strides = [1, 1]} : vector<9x128xf32> to vector<1x128xf32>
    %108 = vector.broadcast %107 : vector<1x128xf32> to vector<4x128xf32>
    %109 = arith.mulf %67, %108 : vector<4x128xf32>
    %110 = vector.extract_strided_slice %0 {offsets = [3, 0], sizes = [1, 128], strides = [1, 1]} : vector<9x128xf32> to vector<1x128xf32>
    %cst_44 = arith.constant 0.000000e+00 : f32
    %111 = vector.broadcast %cst_44 : f32 to vector<4x1xf32>
    %112 = vector.extract_strided_slice %79 {offsets = [0, 0], sizes = [4, 127], strides = [1, 1]} : vector<4x128xf32> to vector<4x127xf32>
    %113 = tpu.concatenate %111, %112 in 1 : vector<4x1xf32>, vector<4x127xf32> -> vector<4x128xf32>
    %114 = vector.broadcast %110 : vector<1x128xf32> to vector<4x128xf32>
    %115 = arith.mulf %113, %114 : vector<4x128xf32>
    %116 = vector.extract_strided_slice %0 {offsets = [4, 0], sizes = [1, 128], strides = [1, 1]} : vector<9x128xf32> to vector<1x128xf32>
    %117 = vector.broadcast %116 : vector<1x128xf32> to vector<4x128xf32>
    %118 = arith.mulf %73, %117 : vector<4x128xf32>
    %119 = vector.extract_strided_slice %0 {offsets = [4, 0], sizes = [1, 128], strides = [1, 1]} : vector<9x128xf32> to vector<1x128xf32>
    %120 = vector.broadcast %119 : vector<1x128xf32> to vector<4x128xf32>
    %121 = arith.mulf %79, %120 : vector<4x128xf32>
    %122 = tpu.concatenate %85, %91, %97, %103, %106, %109, %115, %118, %121 in 0 : vector<4x128xf32>, vector<4x128xf32>, vector<4x128xf32>, vector<4x128xf32>, vector<4x128xf32>, vector<4x128xf32>, vector<4x128xf32>, vector<4x128xf32>, vector<4x128xf32> -> vector<36x128xf32>
    %123 = arith.truncf %122 : vector<36x128xf32> to vector<36x128xbf16>
    %cst_45 = arith.constant dense<0.000000e+00> : vector<8x128xf32>
    %124 = tpu.matmul %7, %123, %cst_45 {dimension_numbers = #tpu.dot_dimension_numbers<[1], [0], [0], [1], [0, 0, 1, 1], [], []>} : vector<8x36xbf16>, vector<36x128xbf16>, vector<8x128xf32> -> vector<8x128xf32>
    %cst_46 = arith.constant dense<0.000000e+00> : vector<8xf32>
    %125 = vector.multi_reduction <add>, %124, %cst_46 [1] : vector<8x128xf32> to vector<8xf32>
    %126 = vector.shape_cast %125 : vector<8xf32> to vector<8x1xf32>
    %cst_47 = arith.constant 0.000000e+00 : f32
    %127 = vector.broadcast %cst_47 : f32 to vector<8x1xf32>
    %128 = arith.addf %127, %126 : vector<8x1xf32>
    %129 = arith.mulf %124, %124 : vector<8x128xf32>
    %cst_48 = arith.constant dense<0.000000e+00> : vector<8xf32>
    %130 = vector.multi_reduction <add>, %129, %cst_48 [1] : vector<8x128xf32> to vector<8xf32>
    %131 = vector.shape_cast %130 : vector<8xf32> to vector<8x1xf32>
    %cst_49 = arith.constant 0.000000e+00 : f32
    %132 = vector.broadcast %cst_49 : f32 to vector<8x1xf32>
    %133 = arith.addf %132, %131 : vector<8x1xf32>
    %cst_50 = arith.constant 1.280000e+02 : f32
    %134 = vector.broadcast %cst_50 : f32 to vector<8x1xf32>
    %135 = arith.divf %128, %134 : vector<8x1xf32>
    %cst_51 = arith.constant 1.280000e+02 : f32
    %136 = vector.broadcast %cst_51 : f32 to vector<8x1xf32>
    %137 = arith.divf %133, %136 : vector<8x1xf32>
    %138 = arith.mulf %135, %135 : vector<8x1xf32>
    %139 = arith.subf %137, %138 : vector<8x1xf32>
    %cst_52 = arith.constant 0.000000e+00 : f32
    %140 = vector.broadcast %cst_52 : f32 to vector<8x1xf32>
    %141 = arith.maximumf %139, %140 : vector<8x1xf32>
    %cst_53 = arith.constant 9.99999974E-6 : f32
    %142 = vector.broadcast %cst_53 : f32 to vector<8x1xf32>
    %143 = arith.addf %141, %142 : vector<8x1xf32>
    %144 = math.rsqrt %143 : vector<8x1xf32>
    %145 = arith.mulf %144, %8 : vector<8x1xf32>
    %146 = arith.mulf %135, %145 : vector<8x1xf32>
    %147 = arith.subf %9, %146 : vector<8x1xf32>
    %148 = vector.broadcast %145 : vector<8x1xf32> to vector<8x128xf32>
    %149 = arith.mulf %124, %148 : vector<8x128xf32>
    %150 = vector.broadcast %147 : vector<8x1xf32> to vector<8x128xf32>
    %151 = arith.addf %149, %150 : vector<8x128xf32>
    %cst_54 = arith.constant 0.000000e+00 : f32
    %152 = vector.broadcast %cst_54 : f32 to vector<8x128xf32>
    %153 = arith.maximumf %151, %152 : vector<8x128xf32>
    %154 = vector.extract_strided_slice %0 {offsets = [0, 0], sizes = [1, 128], strides = [1, 1]} : vector<9x128xf32> to vector<1x128xf32>
    %cst_55 = arith.constant 0.000000e+00 : f32
    %155 = vector.broadcast %cst_55 : f32 to vector<8x9xf32>
    %156 = vector.extract_strided_slice %153 {offsets = [0, 0], sizes = [8, 119], strides = [1, 1]} : vector<8x128xf32> to vector<8x119xf32>
    %157 = tpu.concatenate %155, %156 in 1 : vector<8x9xf32>, vector<8x119xf32> -> vector<8x128xf32>
    %158 = vector.broadcast %154 : vector<1x128xf32> to vector<8x128xf32>
    %159 = arith.mulf %157, %158 : vector<8x128xf32>
    %160 = vector.extract_strided_slice %0 {offsets = [1, 0], sizes = [1, 128], strides = [1, 1]} : vector<9x128xf32> to vector<1x128xf32>
    %cst_56 = arith.constant 0.000000e+00 : f32
    %161 = vector.broadcast %cst_56 : f32 to vector<8x8xf32>
    %162 = vector.extract_strided_slice %153 {offsets = [0, 0], sizes = [8, 120], strides = [1, 1]} : vector<8x128xf32> to vector<8x120xf32>
    %163 = tpu.concatenate %161, %162 in 1 : vector<8x8xf32>, vector<8x120xf32> -> vector<8x128xf32>
    %164 = vector.broadcast %160 : vector<1x128xf32> to vector<8x128xf32>
    %165 = arith.mulf %163, %164 : vector<8x128xf32>
    %166 = vector.extract_strided_slice %0 {offsets = [2, 0], sizes = [1, 128], strides = [1, 1]} : vector<9x128xf32> to vector<1x128xf32>
    %cst_57 = arith.constant 0.000000e+00 : f32
    %167 = vector.broadcast %cst_57 : f32 to vector<8x7xf32>
    %168 = vector.extract_strided_slice %153 {offsets = [0, 0], sizes = [8, 121], strides = [1, 1]} : vector<8x128xf32> to vector<8x121xf32>
    %169 = tpu.concatenate %167, %168 in 1 : vector<8x7xf32>, vector<8x121xf32> -> vector<8x128xf32>
    %170 = vector.broadcast %166 : vector<1x128xf32> to vector<8x128xf32>
    %171 = arith.mulf %169, %170 : vector<8x128xf32>
    %172 = vector.extract_strided_slice %0 {offsets = [3, 0], sizes = [1, 128], strides = [1, 1]} : vector<9x128xf32> to vector<1x128xf32>
    %cst_58 = arith.constant 0.000000e+00 : f32
    %173 = vector.broadcast %cst_58 : f32 to vector<8x1xf32>
    %174 = vector.extract_strided_slice %153 {offsets = [0, 0], sizes = [8, 127], strides = [1, 1]} : vector<8x128xf32> to vector<8x127xf32>
    %175 = tpu.concatenate %173, %174 in 1 : vector<8x1xf32>, vector<8x127xf32> -> vector<8x128xf32>
    %176 = vector.broadcast %172 : vector<1x128xf32> to vector<8x128xf32>
    %177 = arith.mulf %175, %176 : vector<8x128xf32>
    %178 = vector.extract_strided_slice %0 {offsets = [4, 0], sizes = [1, 128], strides = [1, 1]} : vector<9x128xf32> to vector<1x128xf32>
    %179 = vector.broadcast %178 : vector<1x128xf32> to vector<8x128xf32>
    %180 = arith.mulf %153, %179 : vector<8x128xf32>
    %181 = vector.extract_strided_slice %0 {offsets = [5, 0], sizes = [1, 128], strides = [1, 1]} : vector<9x128xf32> to vector<1x128xf32>
    %182 = vector.extract_strided_slice %153 {offsets = [0, 1], sizes = [8, 127], strides = [1, 1]} : vector<8x128xf32> to vector<8x127xf32>
    %cst_59 = arith.constant 0.000000e+00 : f32
    %183 = vector.broadcast %cst_59 : f32 to vector<8x1xf32>
    %184 = tpu.concatenate %182, %183 in 1 : vector<8x127xf32>, vector<8x1xf32> -> vector<8x128xf32>
    %185 = vector.broadcast %181 : vector<1x128xf32> to vector<8x128xf32>
    %186 = arith.mulf %184, %185 : vector<8x128xf32>
    %187 = vector.extract_strided_slice %0 {offsets = [6, 0], sizes = [1, 128], strides = [1, 1]} : vector<9x128xf32> to vector<1x128xf32>
    %188 = vector.extract_strided_slice %153 {offsets = [0, 7], sizes = [8, 121], strides = [1, 1]} : vector<8x128xf32> to vector<8x121xf32>
    %cst_60 = arith.constant 0.000000e+00 : f32
    %189 = vector.broadcast %cst_60 : f32 to vector<8x7xf32>
    %190 = tpu.concatenate %188, %189 in 1 : vector<8x121xf32>, vector<8x7xf32> -> vector<8x128xf32>
    %191 = vector.broadcast %187 : vector<1x128xf32> to vector<8x128xf32>
    %192 = arith.mulf %190, %191 : vector<8x128xf32>
    %193 = vector.extract_strided_slice %0 {offsets = [7, 0], sizes = [1, 128], strides = [1, 1]} : vector<9x128xf32> to vector<1x128xf32>
    %194 = vector.extract_strided_slice %153 {offsets = [0, 8], sizes = [8, 120], strides = [1, 1]} : vector<8x128xf32> to vector<8x120xf32>
    %cst_61 = arith.constant 0.000000e+00 : f32
    %195 = vector.broadcast %cst_61 : f32 to vector<8x8xf32>
    %196 = tpu.concatenate %194, %195 in 1 : vector<8x120xf32>, vector<8x8xf32> -> vector<8x128xf32>
    %197 = vector.broadcast %193 : vector<1x128xf32> to vector<8x128xf32>
    %198 = arith.mulf %196, %197 : vector<8x128xf32>
    %199 = vector.extract_strided_slice %0 {offsets = [8, 0], sizes = [1, 128], strides = [1, 1]} : vector<9x128xf32> to vector<1x128xf32>
    %200 = vector.extract_strided_slice %153 {offsets = [0, 9], sizes = [8, 119], strides = [1, 1]} : vector<8x128xf32> to vector<8x119xf32>
    %cst_62 = arith.constant 0.000000e+00 : f32
    %201 = vector.broadcast %cst_62 : f32 to vector<8x9xf32>
    %202 = tpu.concatenate %200, %201 in 1 : vector<8x119xf32>, vector<8x9xf32> -> vector<8x128xf32>
    %203 = vector.broadcast %199 : vector<1x128xf32> to vector<8x128xf32>
    %204 = arith.mulf %202, %203 : vector<8x128xf32>
    %205 = tpu.concatenate %159, %165, %171, %177, %180, %186, %192, %198, %204 in 0 : vector<8x128xf32>, vector<8x128xf32>, vector<8x128xf32>, vector<8x128xf32>, vector<8x128xf32>, vector<8x128xf32>, vector<8x128xf32>, vector<8x128xf32>, vector<8x128xf32> -> vector<72x128xf32>
    %206 = arith.truncf %205 : vector<72x128xf32> to vector<72x128xbf16>
    %cst_63 = arith.constant dense<0.000000e+00> : vector<8x128xf32>
    %207 = tpu.matmul %10, %206, %cst_63 {dimension_numbers = #tpu.dot_dimension_numbers<[1], [0], [0], [1], [0, 0, 1, 1], [], []>} : vector<8x72xbf16>, vector<72x128xbf16>, vector<8x128xf32> -> vector<8x128xf32>
    %208 = arith.truncf %61 : vector<4x128xf32> to vector<4x128xbf16>
    %cst_64 = arith.constant dense<0.000000e+00> : vector<8x128xf32>
    %209 = tpu.matmul %11, %208, %cst_64 {dimension_numbers = #tpu.dot_dimension_numbers<[1], [0], [0], [1], [0, 0, 1, 1], [], []>} : vector<8x4xbf16>, vector<4x128xbf16>, vector<8x128xf32> -> vector<8x128xf32>
    %210 = arith.addf %209, %207 : vector<8x128xf32>
    %c0_65 = arith.constant 0 : index
    %c0_66 = arith.constant 0 : index
    %211 = vector.load %arg12[%c0_65, %c0_66] : memref<8x1xf32, #tpu.memory_space<vmem>>, vector<8x1xf32>
    %c0_67 = arith.constant 0 : index
    %c0_68 = arith.constant 0 : index
    %212 = vector.load %arg13[%c0_67, %c0_68] : memref<8x1xf32, #tpu.memory_space<vmem>>, vector<8x1xf32>
    %c0_69 = arith.constant 0 : index
    %c0_70 = arith.constant 0 : index
    %213 = vector.load %arg14[%c0_69, %c0_70] : memref<8x72xbf16, #tpu.memory_space<vmem>>, vector<8x72xbf16>
    %c0_71 = arith.constant 0 : index
    %c0_72 = arith.constant 0 : index
    %214 = vector.load %arg15[%c0_71, %c0_72] : memref<8x1xf32, #tpu.memory_space<vmem>>, vector<8x1xf32>
    %c0_73 = arith.constant 0 : index
    %c0_74 = arith.constant 0 : index
    %215 = vector.load %arg16[%c0_73, %c0_74] : memref<8x1xf32, #tpu.memory_space<vmem>>, vector<8x1xf32>
    %c0_75 = arith.constant 0 : index
    %c0_76 = arith.constant 0 : index
    %216 = vector.load %arg17[%c0_75, %c0_76] : memref<8x72xbf16, #tpu.memory_space<vmem>>, vector<8x72xbf16>
    %cst_77 = arith.constant dense<0.000000e+00> : vector<8xf32>
    %217 = vector.multi_reduction <add>, %210, %cst_77 [1] : vector<8x128xf32> to vector<8xf32>
    %218 = vector.shape_cast %217 : vector<8xf32> to vector<8x1xf32>
    %cst_78 = arith.constant 0.000000e+00 : f32
    %219 = vector.broadcast %cst_78 : f32 to vector<8x1xf32>
    %220 = arith.addf %219, %218 : vector<8x1xf32>
    %221 = arith.mulf %210, %210 : vector<8x128xf32>
    %cst_79 = arith.constant dense<0.000000e+00> : vector<8xf32>
    %222 = vector.multi_reduction <add>, %221, %cst_79 [1] : vector<8x128xf32> to vector<8xf32>
    %223 = vector.shape_cast %222 : vector<8xf32> to vector<8x1xf32>
    %cst_80 = arith.constant 0.000000e+00 : f32
    %224 = vector.broadcast %cst_80 : f32 to vector<8x1xf32>
    %225 = arith.addf %224, %223 : vector<8x1xf32>
    %cst_81 = arith.constant 1.280000e+02 : f32
    %226 = vector.broadcast %cst_81 : f32 to vector<8x1xf32>
    %227 = arith.divf %220, %226 : vector<8x1xf32>
    %cst_82 = arith.constant 1.280000e+02 : f32
    %228 = vector.broadcast %cst_82 : f32 to vector<8x1xf32>
    %229 = arith.divf %225, %228 : vector<8x1xf32>
    %230 = arith.mulf %227, %227 : vector<8x1xf32>
    %231 = arith.subf %229, %230 : vector<8x1xf32>
    %cst_83 = arith.constant 0.000000e+00 : f32
    %232 = vector.broadcast %cst_83 : f32 to vector<8x1xf32>
    %233 = arith.maximumf %231, %232 : vector<8x1xf32>
    %cst_84 = arith.constant 9.99999974E-6 : f32
    %234 = vector.broadcast %cst_84 : f32 to vector<8x1xf32>
    %235 = arith.addf %233, %234 : vector<8x1xf32>
    %236 = math.rsqrt %235 : vector<8x1xf32>
    %237 = arith.mulf %236, %211 : vector<8x1xf32>
    %238 = arith.mulf %227, %237 : vector<8x1xf32>
    %239 = arith.subf %212, %238 : vector<8x1xf32>
    %240 = vector.broadcast %237 : vector<8x1xf32> to vector<8x128xf32>
    %241 = arith.mulf %210, %240 : vector<8x128xf32>
    %242 = vector.broadcast %239 : vector<8x1xf32> to vector<8x128xf32>
    %243 = arith.addf %241, %242 : vector<8x128xf32>
    %cst_85 = arith.constant 0.000000e+00 : f32
    %244 = vector.broadcast %cst_85 : f32 to vector<8x128xf32>
    %245 = arith.maximumf %243, %244 : vector<8x128xf32>
    %246 = vector.extract_strided_slice %0 {offsets = [0, 0], sizes = [1, 128], strides = [1, 1]} : vector<9x128xf32> to vector<1x128xf32>
    %cst_86 = arith.constant 0.000000e+00 : f32
    %247 = vector.broadcast %cst_86 : f32 to vector<8x9xf32>
    %248 = vector.extract_strided_slice %245 {offsets = [0, 0], sizes = [8, 119], strides = [1, 1]} : vector<8x128xf32> to vector<8x119xf32>
    %249 = tpu.concatenate %247, %248 in 1 : vector<8x9xf32>, vector<8x119xf32> -> vector<8x128xf32>
    %250 = vector.broadcast %246 : vector<1x128xf32> to vector<8x128xf32>
    %251 = arith.mulf %249, %250 : vector<8x128xf32>
    %252 = vector.extract_strided_slice %0 {offsets = [1, 0], sizes = [1, 128], strides = [1, 1]} : vector<9x128xf32> to vector<1x128xf32>
    %cst_87 = arith.constant 0.000000e+00 : f32
    %253 = vector.broadcast %cst_87 : f32 to vector<8x8xf32>
    %254 = vector.extract_strided_slice %245 {offsets = [0, 0], sizes = [8, 120], strides = [1, 1]} : vector<8x128xf32> to vector<8x120xf32>
    %255 = tpu.concatenate %253, %254 in 1 : vector<8x8xf32>, vector<8x120xf32> -> vector<8x128xf32>
    %256 = vector.broadcast %252 : vector<1x128xf32> to vector<8x128xf32>
    %257 = arith.mulf %255, %256 : vector<8x128xf32>
    %258 = vector.extract_strided_slice %0 {offsets = [2, 0], sizes = [1, 128], strides = [1, 1]} : vector<9x128xf32> to vector<1x128xf32>
    %cst_88 = arith.constant 0.000000e+00 : f32
    %259 = vector.broadcast %cst_88 : f32 to vector<8x7xf32>
    %260 = vector.extract_strided_slice %245 {offsets = [0, 0], sizes = [8, 121], strides = [1, 1]} : vector<8x128xf32> to vector<8x121xf32>
    %261 = tpu.concatenate %259, %260 in 1 : vector<8x7xf32>, vector<8x121xf32> -> vector<8x128xf32>
    %262 = vector.broadcast %258 : vector<1x128xf32> to vector<8x128xf32>
    %263 = arith.mulf %261, %262 : vector<8x128xf32>
    %264 = vector.extract_strided_slice %0 {offsets = [3, 0], sizes = [1, 128], strides = [1, 1]} : vector<9x128xf32> to vector<1x128xf32>
    %cst_89 = arith.constant 0.000000e+00 : f32
    %265 = vector.broadcast %cst_89 : f32 to vector<8x1xf32>
    %266 = vector.extract_strided_slice %245 {offsets = [0, 0], sizes = [8, 127], strides = [1, 1]} : vector<8x128xf32> to vector<8x127xf32>
    %267 = tpu.concatenate %265, %266 in 1 : vector<8x1xf32>, vector<8x127xf32> -> vector<8x128xf32>
    %268 = vector.broadcast %264 : vector<1x128xf32> to vector<8x128xf32>
    %269 = arith.mulf %267, %268 : vector<8x128xf32>
    %270 = vector.extract_strided_slice %0 {offsets = [4, 0], sizes = [1, 128], strides = [1, 1]} : vector<9x128xf32> to vector<1x128xf32>
    %271 = vector.broadcast %270 : vector<1x128xf32> to vector<8x128xf32>
    %272 = arith.mulf %245, %271 : vector<8x128xf32>
    %273 = vector.extract_strided_slice %0 {offsets = [5, 0], sizes = [1, 128], strides = [1, 1]} : vector<9x128xf32> to vector<1x128xf32>
    %274 = vector.extract_strided_slice %245 {offsets = [0, 1], sizes = [8, 127], strides = [1, 1]} : vector<8x128xf32> to vector<8x127xf32>
    %cst_90 = arith.constant 0.000000e+00 : f32
    %275 = vector.broadcast %cst_90 : f32 to vector<8x1xf32>
    %276 = tpu.concatenate %274, %275 in 1 : vector<8x127xf32>, vector<8x1xf32> -> vector<8x128xf32>
    %277 = vector.broadcast %273 : vector<1x128xf32> to vector<8x128xf32>
    %278 = arith.mulf %276, %277 : vector<8x128xf32>
    %279 = vector.extract_strided_slice %0 {offsets = [6, 0], sizes = [1, 128], strides = [1, 1]} : vector<9x128xf32> to vector<1x128xf32>
    %280 = vector.extract_strided_slice %245 {offsets = [0, 7], sizes = [8, 121], strides = [1, 1]} : vector<8x128xf32> to vector<8x121xf32>
    %cst_91 = arith.constant 0.000000e+00 : f32
    %281 = vector.broadcast %cst_91 : f32 to vector<8x7xf32>
    %282 = tpu.concatenate %280, %281 in 1 : vector<8x121xf32>, vector<8x7xf32> -> vector<8x128xf32>
    %283 = vector.broadcast %279 : vector<1x128xf32> to vector<8x128xf32>
    %284 = arith.mulf %282, %283 : vector<8x128xf32>
    %285 = vector.extract_strided_slice %0 {offsets = [7, 0], sizes = [1, 128], strides = [1, 1]} : vector<9x128xf32> to vector<1x128xf32>
    %286 = vector.extract_strided_slice %245 {offsets = [0, 8], sizes = [8, 120], strides = [1, 1]} : vector<8x128xf32> to vector<8x120xf32>
    %cst_92 = arith.constant 0.000000e+00 : f32
    %287 = vector.broadcast %cst_92 : f32 to vector<8x8xf32>
    %288 = tpu.concatenate %286, %287 in 1 : vector<8x120xf32>, vector<8x8xf32> -> vector<8x128xf32>
    %289 = vector.broadcast %285 : vector<1x128xf32> to vector<8x128xf32>
    %290 = arith.mulf %288, %289 : vector<8x128xf32>
    %291 = vector.extract_strided_slice %0 {offsets = [8, 0], sizes = [1, 128], strides = [1, 1]} : vector<9x128xf32> to vector<1x128xf32>
    %292 = vector.extract_strided_slice %245 {offsets = [0, 9], sizes = [8, 119], strides = [1, 1]} : vector<8x128xf32> to vector<8x119xf32>
    %cst_93 = arith.constant 0.000000e+00 : f32
    %293 = vector.broadcast %cst_93 : f32 to vector<8x9xf32>
    %294 = tpu.concatenate %292, %293 in 1 : vector<8x119xf32>, vector<8x9xf32> -> vector<8x128xf32>
    %295 = vector.broadcast %291 : vector<1x128xf32> to vector<8x128xf32>
    %296 = arith.mulf %294, %295 : vector<8x128xf32>
    %297 = tpu.concatenate %251, %257, %263, %269, %272, %278, %284, %290, %296 in 0 : vector<8x128xf32>, vector<8x128xf32>, vector<8x128xf32>, vector<8x128xf32>, vector<8x128xf32>, vector<8x128xf32>, vector<8x128xf32>, vector<8x128xf32>, vector<8x128xf32> -> vector<72x128xf32>
    %298 = arith.truncf %297 : vector<72x128xf32> to vector<72x128xbf16>
    %cst_94 = arith.constant dense<0.000000e+00> : vector<8x128xf32>
    %299 = tpu.matmul %213, %298, %cst_94 {dimension_numbers = #tpu.dot_dimension_numbers<[1], [0], [0], [1], [0, 0, 1, 1], [], []>} : vector<8x72xbf16>, vector<72x128xbf16>, vector<8x128xf32> -> vector<8x128xf32>
    %cst_95 = arith.constant dense<0.000000e+00> : vector<8xf32>
    %300 = vector.multi_reduction <add>, %299, %cst_95 [1] : vector<8x128xf32> to vector<8xf32>
    %301 = vector.shape_cast %300 : vector<8xf32> to vector<8x1xf32>
    %cst_96 = arith.constant 0.000000e+00 : f32
    %302 = vector.broadcast %cst_96 : f32 to vector<8x1xf32>
    %303 = arith.addf %302, %301 : vector<8x1xf32>
    %304 = arith.mulf %299, %299 : vector<8x128xf32>
    %cst_97 = arith.constant dense<0.000000e+00> : vector<8xf32>
    %305 = vector.multi_reduction <add>, %304, %cst_97 [1] : vector<8x128xf32> to vector<8xf32>
    %306 = vector.shape_cast %305 : vector<8xf32> to vector<8x1xf32>
    %cst_98 = arith.constant 0.000000e+00 : f32
    %307 = vector.broadcast %cst_98 : f32 to vector<8x1xf32>
    %308 = arith.addf %307, %306 : vector<8x1xf32>
    %cst_99 = arith.constant 1.280000e+02 : f32
    %309 = vector.broadcast %cst_99 : f32 to vector<8x1xf32>
    %310 = arith.divf %303, %309 : vector<8x1xf32>
    %cst_100 = arith.constant 1.280000e+02 : f32
    %311 = vector.broadcast %cst_100 : f32 to vector<8x1xf32>
    %312 = arith.divf %308, %311 : vector<8x1xf32>
    %313 = arith.mulf %310, %310 : vector<8x1xf32>
    %314 = arith.subf %312, %313 : vector<8x1xf32>
    %cst_101 = arith.constant 0.000000e+00 : f32
    %315 = vector.broadcast %cst_101 : f32 to vector<8x1xf32>
    %316 = arith.maximumf %314, %315 : vector<8x1xf32>
    %cst_102 = arith.constant 9.99999974E-6 : f32
    %317 = vector.broadcast %cst_102 : f32 to vector<8x1xf32>
    %318 = arith.addf %316, %317 : vector<8x1xf32>
    %319 = math.rsqrt %318 : vector<8x1xf32>
    %320 = arith.mulf %319, %214 : vector<8x1xf32>
    %321 = arith.mulf %310, %320 : vector<8x1xf32>
    %322 = arith.subf %215, %321 : vector<8x1xf32>
    %323 = vector.broadcast %320 : vector<8x1xf32> to vector<8x128xf32>
    %324 = arith.mulf %299, %323 : vector<8x128xf32>
    %325 = vector.broadcast %322 : vector<8x1xf32> to vector<8x128xf32>
    %326 = arith.addf %324, %325 : vector<8x128xf32>
    %cst_103 = arith.constant 0.000000e+00 : f32
    %327 = vector.broadcast %cst_103 : f32 to vector<8x128xf32>
    %328 = arith.maximumf %326, %327 : vector<8x128xf32>
    %329 = vector.extract_strided_slice %0 {offsets = [0, 0], sizes = [1, 128], strides = [1, 1]} : vector<9x128xf32> to vector<1x128xf32>
    %cst_104 = arith.constant 0.000000e+00 : f32
    %330 = vector.broadcast %cst_104 : f32 to vector<8x9xf32>
    %331 = vector.extract_strided_slice %328 {offsets = [0, 0], sizes = [8, 119], strides = [1, 1]} : vector<8x128xf32> to vector<8x119xf32>
    %332 = tpu.concatenate %330, %331 in 1 : vector<8x9xf32>, vector<8x119xf32> -> vector<8x128xf32>
    %333 = vector.broadcast %329 : vector<1x128xf32> to vector<8x128xf32>
    %334 = arith.mulf %332, %333 : vector<8x128xf32>
    %335 = vector.extract_strided_slice %0 {offsets = [1, 0], sizes = [1, 128], strides = [1, 1]} : vector<9x128xf32> to vector<1x128xf32>
    %cst_105 = arith.constant 0.000000e+00 : f32
    %336 = vector.broadcast %cst_105 : f32 to vector<8x8xf32>
    %337 = vector.extract_strided_slice %328 {offsets = [0, 0], sizes = [8, 120], strides = [1, 1]} : vector<8x128xf32> to vector<8x120xf32>
    %338 = tpu.concatenate %336, %337 in 1 : vector<8x8xf32>, vector<8x120xf32> -> vector<8x128xf32>
    %339 = vector.broadcast %335 : vector<1x128xf32> to vector<8x128xf32>
    %340 = arith.mulf %338, %339 : vector<8x128xf32>
    %341 = vector.extract_strided_slice %0 {offsets = [2, 0], sizes = [1, 128], strides = [1, 1]} : vector<9x128xf32> to vector<1x128xf32>
    %cst_106 = arith.constant 0.000000e+00 : f32
    %342 = vector.broadcast %cst_106 : f32 to vector<8x7xf32>
    %343 = vector.extract_strided_slice %328 {offsets = [0, 0], sizes = [8, 121], strides = [1, 1]} : vector<8x128xf32> to vector<8x121xf32>
    %344 = tpu.concatenate %342, %343 in 1 : vector<8x7xf32>, vector<8x121xf32> -> vector<8x128xf32>
    %345 = vector.broadcast %341 : vector<1x128xf32> to vector<8x128xf32>
    %346 = arith.mulf %344, %345 : vector<8x128xf32>
    %347 = vector.extract_strided_slice %0 {offsets = [3, 0], sizes = [1, 128], strides = [1, 1]} : vector<9x128xf32> to vector<1x128xf32>
    %cst_107 = arith.constant 0.000000e+00 : f32
    %348 = vector.broadcast %cst_107 : f32 to vector<8x1xf32>
    %349 = vector.extract_strided_slice %328 {offsets = [0, 0], sizes = [8, 127], strides = [1, 1]} : vector<8x128xf32> to vector<8x127xf32>
    %350 = tpu.concatenate %348, %349 in 1 : vector<8x1xf32>, vector<8x127xf32> -> vector<8x128xf32>
    %351 = vector.broadcast %347 : vector<1x128xf32> to vector<8x128xf32>
    %352 = arith.mulf %350, %351 : vector<8x128xf32>
    %353 = vector.extract_strided_slice %0 {offsets = [4, 0], sizes = [1, 128], strides = [1, 1]} : vector<9x128xf32> to vector<1x128xf32>
    %354 = vector.broadcast %353 : vector<1x128xf32> to vector<8x128xf32>
    %355 = arith.mulf %328, %354 : vector<8x128xf32>
    %356 = vector.extract_strided_slice %0 {offsets = [5, 0], sizes = [1, 128], strides = [1, 1]} : vector<9x128xf32> to vector<1x128xf32>
    %357 = vector.extract_strided_slice %328 {offsets = [0, 1], sizes = [8, 127], strides = [1, 1]} : vector<8x128xf32> to vector<8x127xf32>
    %cst_108 = arith.constant 0.000000e+00 : f32
    %358 = vector.broadcast %cst_108 : f32 to vector<8x1xf32>
    %359 = tpu.concatenate %357, %358 in 1 : vector<8x127xf32>, vector<8x1xf32> -> vector<8x128xf32>
    %360 = vector.broadcast %356 : vector<1x128xf32> to vector<8x128xf32>
    %361 = arith.mulf %359, %360 : vector<8x128xf32>
    %362 = vector.extract_strided_slice %0 {offsets = [6, 0], sizes = [1, 128], strides = [1, 1]} : vector<9x128xf32> to vector<1x128xf32>
    %363 = vector.extract_strided_slice %328 {offsets = [0, 7], sizes = [8, 121], strides = [1, 1]} : vector<8x128xf32> to vector<8x121xf32>
    %cst_109 = arith.constant 0.000000e+00 : f32
    %364 = vector.broadcast %cst_109 : f32 to vector<8x7xf32>
    %365 = tpu.concatenate %363, %364 in 1 : vector<8x121xf32>, vector<8x7xf32> -> vector<8x128xf32>
    %366 = vector.broadcast %362 : vector<1x128xf32> to vector<8x128xf32>
    %367 = arith.mulf %365, %366 : vector<8x128xf32>
    %368 = vector.extract_strided_slice %0 {offsets = [7, 0], sizes = [1, 128], strides = [1, 1]} : vector<9x128xf32> to vector<1x128xf32>
    %369 = vector.extract_strided_slice %328 {offsets = [0, 8], sizes = [8, 120], strides = [1, 1]} : vector<8x128xf32> to vector<8x120xf32>
    %cst_110 = arith.constant 0.000000e+00 : f32
    %370 = vector.broadcast %cst_110 : f32 to vector<8x8xf32>
    %371 = tpu.concatenate %369, %370 in 1 : vector<8x120xf32>, vector<8x8xf32> -> vector<8x128xf32>
    %372 = vector.broadcast %368 : vector<1x128xf32> to vector<8x128xf32>
    %373 = arith.mulf %371, %372 : vector<8x128xf32>
    %374 = vector.extract_strided_slice %0 {offsets = [8, 0], sizes = [1, 128], strides = [1, 1]} : vector<9x128xf32> to vector<1x128xf32>
    %375 = vector.extract_strided_slice %328 {offsets = [0, 9], sizes = [8, 119], strides = [1, 1]} : vector<8x128xf32> to vector<8x119xf32>
    %cst_111 = arith.constant 0.000000e+00 : f32
    %376 = vector.broadcast %cst_111 : f32 to vector<8x9xf32>
    %377 = tpu.concatenate %375, %376 in 1 : vector<8x119xf32>, vector<8x9xf32> -> vector<8x128xf32>
    %378 = vector.broadcast %374 : vector<1x128xf32> to vector<8x128xf32>
    %379 = arith.mulf %377, %378 : vector<8x128xf32>
    %380 = tpu.concatenate %334, %340, %346, %352, %355, %361, %367, %373, %379 in 0 : vector<8x128xf32>, vector<8x128xf32>, vector<8x128xf32>, vector<8x128xf32>, vector<8x128xf32>, vector<8x128xf32>, vector<8x128xf32>, vector<8x128xf32>, vector<8x128xf32> -> vector<72x128xf32>
    %381 = arith.truncf %380 : vector<72x128xf32> to vector<72x128xbf16>
    %cst_112 = arith.constant dense<0.000000e+00> : vector<8x128xf32>
    %382 = tpu.matmul %216, %381, %cst_112 {dimension_numbers = #tpu.dot_dimension_numbers<[1], [0], [0], [1], [0, 0, 1, 1], [], []>} : vector<8x72xbf16>, vector<72x128xbf16>, vector<8x128xf32> -> vector<8x128xf32>
    %383 = arith.addf %210, %382 : vector<8x128xf32>
    %c0_113 = arith.constant 0 : index
    %c0_114 = arith.constant 0 : index
    %384 = vector.load %arg18[%c0_113, %c0_114] : memref<8x128xf32, #tpu.memory_space<vmem>>, vector<8x128xf32>
    tpu.vector_store %arg18[%c0_113, %c0_114], %383 {strides = array<i32>} : memref<8x128xf32, #tpu.memory_space<vmem>>, vector<8x128xf32>,
    return
  }
}

</mosaic_0001>

<llo_original>
// kernel: _lambda_.1
$region0: #{_lambda_.1}
  #allocation0 [shape = 'u32[]', space=smem, size = 0x4, offset = 0x4, fixed_abs, tag = 'smem constant byte address 0x4 - core index']
  #allocation1 [shape = 'u32[144,128]{1,0:T(1,128)}', space=vmem, size = 0x12000, scoped, tag = 'internal scratch']
  %s0 = inlined_call_operand.vmem [shape: f32[4,128], index: 0, kind: input, shape index: {}]
  %s1 = inlined_call_operand.vmem [shape: f32[4,128], index: 1, kind: input, shape index: {}]
  %s2 = inlined_call_operand.vmem [shape: f32[4,128], index: 2, kind: input, shape index: {}]
  %s3 = inlined_call_operand.vmem [shape: f32[4,128], index: 3, kind: input, shape index: {}]
  %s4 = inlined_call_operand.vmem [shape: f32[9,128], index: 4, kind: input, shape index: {}]
  %s5 = inlined_call_operand.vmem [shape: f32[4,1], index: 5, kind: input, shape index: {}]
  %s6 = inlined_call_operand.vmem [shape: f32[4,1], index: 6, kind: input, shape index: {}]
  %s7 = inlined_call_operand.vmem [shape: bf16[8,36], index: 7, kind: input, shape index: {}]
  %s8 = inlined_call_operand.vmem [shape: f32[8,1], index: 8, kind: input, shape index: {}]
  %s9 = inlined_call_operand.vmem [shape: f32[8,1], index: 9, kind: input, shape index: {}]
  %s10 = inlined_call_operand.vmem [shape: bf16[8,72], index: 10, kind: input, shape index: {}]
  %s11 = inlined_call_operand.vmem [shape: bf16[8,4], index: 11, kind: input, shape index: {}]
  %s12 = inlined_call_operand.vmem [shape: f32[8,1], index: 12, kind: input, shape index: {}]
  %s13 = inlined_call_operand.vmem [shape: f32[8,1], index: 13, kind: input, shape index: {}]
  %s14 = inlined_call_operand.vmem [shape: bf16[8,72], index: 14, kind: input, shape index: {}]
  %s15 = inlined_call_operand.vmem [shape: f32[8,1], index: 15, kind: input, shape index: {}]
  %s16 = inlined_call_operand.vmem [shape: f32[8,1], index: 16, kind: input, shape index: {}]
  %s17 = inlined_call_operand.vmem [shape: bf16[8,72], index: 17, kind: input, shape index: {}]
  %s18 = inlined_call_operand.vmem [shape: f32[8,128], index: 18, kind: output, shape index: {}]
  %s19 = sld [smem:[#allocation0]]
  $region82: #{_lambda_.1} parent=0
    _
  %s21 = ssub.s32 1, %s19
  %s22 = scalar_select 0, %s21, %s19
  // Predicated region
  $region2: #{_lambda_.1} parent=0 // pred_check
    _
  $region3: #{_lambda_.1} parent=0 // pred_check_branch
    %24 = sbr.rel (0) target = $region5
  $region4: #{_lambda_.1} parent=0 // pred_region
    _
  $region5: #{_lambda_.1} parent=0 // pred_fallthru
    _
  // Predicated region
  $region6: #{_lambda_.1} parent=0 // pred_check
    _
  $region7: #{_lambda_.1} parent=0 // pred_check_branch
    %26 = sbr.rel (0) target = $region9
  $region8: #{_lambda_.1} parent=0 // pred_region
    _
  $region9: #{_lambda_.1} parent=0 // pred_fallthru
    _
  // Predicated region
  $region10: #{_lambda_.1} parent=0 // pred_check
    _
  $region11: #{_lambda_.1} parent=0 // pred_check_branch
    %28 = sbr.rel (0) target = $region13
  $region12: #{_lambda_.1} parent=0 // pred_region
    _
  $region13: #{_lambda_.1} parent=0 // pred_fallthru
    _
  // Predicated region
  $region14: #{_lambda_.1} parent=0 // pred_check
    _
  $region15: #{_lambda_.1} parent=0 // pred_check_branch
    %30 = sbr.rel (0) target = $region17
  $region16: #{_lambda_.1} parent=0 // pred_region
    _
  $region17: #{_lambda_.1} parent=0 // pred_fallthru
    _
  // Predicated region
  $region18: #{_lambda_.1} parent=0 // pred_check
    _
  $region19: #{_lambda_.1} parent=0 // pred_check_branch
    %32 = sbr.rel (0) target = $region21
  $region20: #{_lambda_.1} parent=0 // pred_region
    _
  $region21: #{_lambda_.1} parent=0 // pred_fallthru
    _
  // Predicated region
  $region22: #{_lambda_.1} parent=0 // pred_check
    _
  $region23: #{_lambda_.1} parent=0 // pred_check_branch
    %34 = sbr.rel (0) target = $region25
  $region24: #{_lambda_.1} parent=0 // pred_region
    _
  $region25: #{_lambda_.1} parent=0 // pred_fallthru
    _
  // Predicated region
  $region26: #{_lambda_.1} parent=0 // pred_check
    _
  $region27: #{_lambda_.1} parent=0 // pred_check_branch
    %36 = sbr.rel (0) target = $region29
  $region28: #{_lambda_.1} parent=0 // pred_region
    _
  $region29: #{_lambda_.1} parent=0 // pred_fallthru
    _
  // Predicated region
  $region30: #{_lambda_.1} parent=0 // pred_check
    _
  $region31: #{_lambda_.1} parent=0 // pred_check_branch
    %38 = sbr.rel (0) target = $region33
  $region32: #{_lambda_.1} parent=0 // pred_region
    _
  $region33: #{_lambda_.1} parent=0 // pred_fallthru
    _
  // Predicated region
  $region34: #{_lambda_.1} parent=0 // pred_check
    _
  $region35: #{_lambda_.1} parent=0 // pred_check_branch
    %40 = sbr.rel (0) target = $region37
  $region36: #{_lambda_.1} parent=0 // pred_region
    _
  $region37: #{_lambda_.1} parent=0 // pred_fallthru
    _
  // Predicated region
  $region38: #{_lambda_.1} parent=0 // pred_check
    _
  $region39: #{_lambda_.1} parent=0 // pred_check_branch
    %42 = sbr.rel (0) target = $region41
  $region40: #{_lambda_.1} parent=0 // pred_region
    _
  $region41: #{_lambda_.1} parent=0 // pred_fallthru
    _
  // Predicated region
  $region42: #{_lambda_.1} parent=0 // pred_check
    _
  $region43: #{_lambda_.1} parent=0 // pred_check_branch
    %44 = sbr.rel (0) target = $region45
  $region44: #{_lambda_.1} parent=0 // pred_region
    _
  $region45: #{_lambda_.1} parent=0 // pred_fallthru
    _
  // Predicated region
  $region46: #{_lambda_.1} parent=0 // pred_check
    _
  $region47: #{_lambda_.1} parent=0 // pred_check_branch
    %46 = sbr.rel (0) target = $region49
  $region48: #{_lambda_.1} parent=0 // pred_region
    _
  $region49: #{_lambda_.1} parent=0 // pred_fallthru
    _
  // Predicated region
  $region50: #{_lambda_.1} parent=0 // pred_check
    _
  $region51: #{_lambda_.1} parent=0 // pred_check_branch
    %48 = sbr.rel (0) target = $region53
  $region52: #{_lambda_.1} parent=0 // pred_region
    _
  $region53: #{_lambda_.1} parent=0 // pred_fallthru
    _
  // Predicated region
  $region54: #{_lambda_.1} parent=0 // pred_check
    _
  $region55: #{_lambda_.1} parent=0 // pred_check_branch
    %50 = sbr.rel (0) target = $region57
  $region56: #{_lambda_.1} parent=0 // pred_region
    _
  $region57: #{_lambda_.1} parent=0 // pred_fallthru
    _
  // Predicated region
  $region58: #{_lambda_.1} parent=0 // pred_check
    _
  $region59: #{_lambda_.1} parent=0 // pred_check_branch
    %52 = sbr.rel (0) target = $region61
  $region60: #{_lambda_.1} parent=0 // pred_region
    _
  $region61: #{_lambda_.1} parent=0 // pred_fallthru
    _
  // Predicated region
  $region62: #{_lambda_.1} parent=0 // pred_check
    _
  $region63: #{_lambda_.1} parent=0 // pred_check_branch
    %54 = sbr.rel (0) target = $region65
  $region64: #{_lambda_.1} parent=0 // pred_region
    _
  $region65: #{_lambda_.1} parent=0 // pred_fallthru
    _
  // Predicated region
  $region66: #{_lambda_.1} parent=0 // pred_check
    _
  $region67: #{_lambda_.1} parent=0 // pred_check_branch
    %56 = sbr.rel (0) target = $region69
  $region68: #{_lambda_.1} parent=0 // pred_region
    _
  $region69: #{_lambda_.1} parent=0 // pred_fallthru
    _
  // Predicated region
  $region70: #{_lambda_.1} parent=0 // pred_check
    _
  $region71: #{_lambda_.1} parent=0 // pred_check_branch
    %58 = sbr.rel (0) target = $region73
  $region72: #{_lambda_.1} parent=0 // pred_region
    _
  $region73: #{_lambda_.1} parent=0 // pred_fallthru
    _
  %v60 = vld [vmem:[%s4] sm:$0xff]
  %v61 = vld [vmem:[%s4 + $0x8] sm:$0x1]
  %v62 = vld [vmem:[%s0] sm:$0xf]
  %v63 = vld [vmem:[%s1] sm:$0xf]
  %v64 = vld [vmem:[%s2] sm:$0xf]
  %v65 = vld [vmem:[%s3] sm:$0xf]
  %v66 = vld [vmem:[%s5] sm:$0xf]
  %v67 = vld [vmem:[%s6] sm:$0xf]
  %v68 = vld [vmem:[%s7] sm:$0xf]
  %v69 = vld [vmem:[%s8] sm:$0xff]
  %v70 = vld [vmem:[%s9] sm:$0xff]
  %v71 = vld [vmem:[%s10] sm:$0xf]
  %v72 = vld [vmem:[%s11] sm:$0xf]
  %vm73 = vcmask 1043456
  %v74 = vsel %vm73, %v62, 0.0
  %75 = vadd.xlane.f32.xlu0 %v74
  %v76 = vpop.xlane.xlu0 %75
  %v77 = vadd.f32 %v76, 0.0
  %v78 = vsel %vm73, %v63, 0.0
  %79 = vadd.xlane.f32.xlu0 %v78
  %v80 = vpop.xlane.xlu0 %79
  %v81 = vadd.f32 %v77, %v80
  %v82 = vsel %vm73, %v64, 0.0
  %83 = vadd.xlane.f32.xlu0 %v82
  %v84 = vpop.xlane.xlu0 %83
  %v85 = vadd.f32 %v81, %v84
  %v86 = vsel %vm73, %v65, 0.0
  %87 = vadd.xlane.f32.xlu0 %v86
  %v88 = vpop.xlane.xlu0 %87
  %v89 = vadd.f32 %v85, %v88
  %v90 = vmul.f32 %v62, %v62
  %v91 = vsel %vm73, %v90, 0.0
  %92 = vadd.xlane.f32.xlu0 %v91
  %v93 = vpop.xlane.xlu0 %92
  %v94 = vadd.f32 %v93, 0.0
  %v95 = vmul.f32 %v63, %v63
  %v96 = vsel %vm73, %v95, 0.0
  %97 = vadd.xlane.f32.xlu0 %v96
  %v98 = vpop.xlane.xlu0 %97
  %v99 = vadd.f32 %v94, %v98
  %v100 = vmul.f32 %v64, %v64
  %v101 = vsel %vm73, %v100, 0.0
  %102 = vadd.xlane.f32.xlu0 %v101
  %v103 = vpop.xlane.xlu0 %102
  %v104 = vadd.f32 %v99, %v103
  %v105 = vmul.f32 %v65, %v65
  %v106 = vsel %vm73, %v105, 0.0
  %107 = vadd.xlane.f32.xlu0 %v106
  %v108 = vpop.xlane.xlu0 %107
  %v109 = vadd.f32 %v104, %v108
  %v110 = vrcp.pop 512.0
  %v111 = vmul.f32 %v89, %v110
  %v112 = vmul.f32 %v109, %v110
  %v113 = vmul.f32 %v111, %v111
  %v114 = vsub.f32 %v112, %v113
  %v115 = vmax.f32 %v114, 0.0
  %v116 = vadd.f32 %v115, 1e-05
  %v117 = vrsqrt.pop %v116
  %v118 = vmul.f32 %v117, %v66
  %v119 = vmul.f32 %v111, %v118
  %v120 = vsub.f32 %v67, %v119
  %122 = vset.pattern.permute.xlu0 0
  %123 = vperm.xlu0 %122, %v118
  %v124 = vpop.permute.xlu0 %123
  %v126 = vmul.f32 %v62, %v124
  %128 = vset.pattern.permute.xlu0 0
  %129 = vperm.xlu0 %128, %v120
  %v130 = vpop.permute.xlu0 %129
  %v132 = vadd.f32 %v126, %v130
  %v133 = vmax.f32 %v132, 0.0
  %v134 = vmul.f32 %v63, %v124
  %v135 = vadd.f32 %v134, %v130
  %v136 = vmax.f32 %v135, 0.0
  %v137 = vmul.f32 %v64, %v124
  %v138 = vadd.f32 %v137, %v130
  %v139 = vmax.f32 %v138, 0.0
  %v140 = vmul.f32 %v65, %v124
  %v141 = vadd.f32 %v140, %v130
  %v142 = vmax.f32 %v141, 0.0
  %144 = vrot.lane.b32.xlu0 %v142, 9
  %v145 = vpop.permute.xlu0 %144
  %vm147 = vcmask 72704
  %v148 = vsel %vm147, 0.0, %v145
  %v149 = vlaneseq
  %v150 = vshrl.u32 %v149, 7
  %v151 = vsub.s32 0, %v150
  %v152 = vrot.slane %v60, %v151
  %v153 = vmul.f32 %v148, %v152
  %155 = vrot.lane.b32.xlu0 %v139, 8
  %v156 = vpop.permute.xlu0 %155
  %vm158 = vcmask 64512
  %v159 = vsel %vm158, 0.0, %v156
  %v160 = vlaneseq
  %v161 = vshrl.u32 %v160, 7
  %v162 = vsub.s32 1, %v161
  %v163 = vrot.slane %v60, %v162
  %v164 = vmul.f32 %v159, %v163
  %165 = vrot.lane.b32.xlu0 %v142, 8
  %v166 = vpop.permute.xlu0 %165
  %v168 = vsel %vm158, 0.0, %v166
  %v169 = vmul.f32 %v168, %v163
  %171 = vrot.lane.b32.xlu0 %v136, 1
  %v172 = vpop.permute.xlu0 %171
  %vm174 = vcmask 7168
  %v175 = vsel %vm174, 0.0, %v172
  %v176 = vlaneseq
  %v177 = vshrl.u32 %v176, 7
  %v178 = vsub.s32 3, %v177
  %v179 = vrot.slane %v60, %v178
  %v180 = vmul.f32 %v175, %v179
  %v181 = vlaneseq
  %v182 = vshrl.u32 %v181, 7
  %v183 = vsub.s32 4, %v182
  %v184 = vrot.slane %v60, %v183
  %v185 = vmul.f32 %v133, %v184
  %v186 = vmul.f32 %v136, %v184
  %187 = vrot.lane.b32.xlu0 %v142, 1
  %v188 = vpop.permute.xlu0 %187
  %v190 = vsel %vm174, 0.0, %v188
  %v191 = vmul.f32 %v190, %v179
  %v192 = vmul.f32 %v139, %v184
  %v193 = vmul.f32 %v142, %v184
  %v195 = vrot.slane %v164, 4
  %v198 = vrot.slane %v180, 4
  %v201 = vrot.slane %v186, 4
  %v204 = vrot.slane %v192, 4
  %v206 = vsel %vm73, %v153, %v195
  %v207 = vsel %vm73, %v169, %v198
  %v208 = vsel %vm73, %v185, %v201
  %v209 = vsel %vm73, %v191, %v204
  %v210 = vpack.c.bf16 %v207, %v206
  %v211 = vpack.c.bf16 %v209, %v208
  %v212 = vpack.c.bf16 %v193, %v193
  %vm213 = vcmask 293888
  %v215 = vsel %vm213, %v68, 0
  %vm217 = vcmask 1041408
  %v219 = vsel %vm217, %v212, 0
  %221 = vmatprep.subr.bf16.mxu0 0
  %222 = vmatpush1.bf16.msra.mxu0 0
  %223 = vmatprep.subr.bf16.mxu0 0
  %224 = vmatpush1.bf16.msra.mxu0 0
  %225 = vmatprep.subr.bf16.mxu0 0
  %226 = vmatpush1.bf16.msra.mxu0 0
  %227 = vmatprep.subr.bf16.mxu0 0
  %228 = vmatpush1.bf16.msra.mxu0 0
  %229 = vmatprep.subr.bf16.mxu0 0
  %230 = vmatpush1.bf16.msra.mxu0 0
  %231 = vmatprep.subr.bf16.mxu0 0
  %232 = vmatpush1.bf16.msra.mxu0 %v219
  %233 = vmatprep.subr.bf16.mxu0 0
  %234 = vmatpush1.bf16.msra.mxu0 %v211
  %235 = vmatprep.subr.bf16.mxu0 0
  %236 = vmatpush1.bf16.msra.mxu0 %v210
  %237 = vmatprep.subr.bf16.mxu0 0
  %238 = vmatpush2.bf16.msra.mxu0 0
  %239 = vmatprep.subr.bf16.mxu0 0
  %240 = vmatpush2.bf16.msra.mxu0 0
  %241 = vmatprep.subr.bf16.mxu0 0
  %242 = vmatpush2.bf16.msra.mxu0 0
  %243 = vmatprep.subr.bf16.mxu0 0
  %244 = vmatpush2.bf16.msra.mxu0 0
  %245 = vmatprep.subr.bf16.mxu0 0
  %246 = vmatpush2.bf16.msra.mxu0 0
  %247 = vmatprep.subr.bf16.mxu0 0
  %248 = vmatpush2.bf16.msra.mxu0 0
  %249 = vmatprep.subr.bf16.mxu0 0
  %250 = vmatpush2.bf16.msra.mxu0 0
  %251 = vmatprep.subr.bf16.mxu0 0
  %252 = vmatpush2.bf16.msra.mxu0 0
  %253 = vmatprep.mubr.bf16.mxu0 0
  %254 = vmatmul.mubr.bf16.gmra.mxu0 %v215
  %v255 = vpop.f32.mrf.mxu0
  %v256 = vadd.f32 0.0, %v255
  %v257 = vpop.f32.mrf.mxu0
  %v258 = vpop.f32.mrf.mxu0
  %v259 = vpop.f32.mrf.mxu0
  %260 = vdwg.mxu0
  %261 = vadd.xlane.f32.xlu0 %v256
  %v262 = vpop.xlane.xlu0 %261
  %v263 = vadd.f32 %v262, 0.0
  %v264 = vmul.f32 %v256, %v256
  %265 = vadd.xlane.f32.xlu0 %v264
  %v266 = vpop.xlane.xlu0 %265
  %v267 = vadd.f32 %v266, 0.0
  %v268 = vrcp.pop 128.0
  %v269 = vmul.f32 %v263, %v268
  %v270 = vmul.f32 %v267, %v268
  %v271 = vmul.f32 %v269, %v269
  %v272 = vsub.f32 %v270, %v271
  %v273 = vmax.f32 %v272, 0.0
  %v274 = vadd.f32 %v273, 1e-05
  %v275 = vrsqrt.pop %v274
  %v276 = vmul.f32 %v275, %v69
  %v277 = vmul.f32 %v269, %v276
  %v278 = vsub.f32 %v70, %v277
  %280 = vset.pattern.permute.xlu0 0
  %281 = vperm.xlu0 %280, %v276
  %v282 = vpop.permute.xlu0 %281
  %v284 = vmul.f32 %v256, %v282
  %286 = vset.pattern.permute.xlu0 0
  %287 = vperm.xlu0 %286, %v278
  %v288 = vpop.permute.xlu0 %287
  %v290 = vadd.f32 %v284, %v288
  %v291 = vmax.f32 %v290, 0.0
  %293 = vrot.lane.b32.xlu0 %v291, 9
  %v294 = vpop.permute.xlu0 %293
  %v296 = vsel %vm147, 0.0, %v294
  %v297 = vmul.f32 %v296, %v152
  %298 = vrot.lane.b32.xlu0 %v291, 8
  %v299 = vpop.permute.xlu0 %298
  %v301 = vsel %vm158, 0.0, %v299
  %v302 = vmul.f32 %v301, %v163
  %303 = vrot.lane.b32.xlu0 %v291, 7
  %v304 = vpop.permute.xlu0 %303
  %vm306 = vcmask 56320
  %v307 = vsel %vm306, 0.0, %v304
  %v308 = vlaneseq
  %v309 = vshrl.u32 %v308, 7
  %v310 = vsub.s32 2, %v309
  %v311 = vrot.slane %v60, %v310
  %v312 = vmul.f32 %v307, %v311
  %313 = vrot.lane.b32.xlu0 %v291, 1
  %v314 = vpop.permute.xlu0 %313
  %v316 = vsel %vm174, 0.0, %v314
  %v317 = vmul.f32 %v316, %v179
  %v318 = vmul.f32 %v291, %v184
  %319 = vrot.lane.b32.xlu0 %v291, 127
  %v320 = vpop.permute.xlu0 %319
  %vm322 = vcmask 1039360
  %v323 = vsel %vm322, %v320, 0.0
  %v324 = vlaneseq
  %v325 = vshrl.u32 %v324, 7
  %v326 = vsub.s32 5, %v325
  %v327 = vrot.slane %v60, %v326
  %v328 = vmul.f32 %v323, %v327
  %329 = vrot.lane.b32.xlu0 %v291, 121
  %v330 = vpop.permute.xlu0 %329
  %vm332 = vcmask 990208
  %v333 = vsel %vm332, %v330, 0.0
  %v334 = vlaneseq
  %v335 = vshrl.u32 %v334, 7
  %v336 = vsub.s32 6, %v335
  %v337 = vrot.slane %v60, %v336
  %v338 = vmul.f32 %v333, %v337
  %339 = vrot.lane.b32.xlu0 %v291, 120
  %v340 = vpop.permute.xlu0 %339
  %vm342 = vcmask 982016
  %v343 = vsel %vm342, %v340, 0.0
  %v344 = vlaneseq
  %v345 = vshrl.u32 %v344, 7
  %v346 = vsub.s32 7, %v345
  %v347 = vrot.slane %v60, %v346
  %v348 = vmul.f32 %v343, %v347
  %349 = vrot.lane.b32.xlu0 %v291, 119
  %v350 = vpop.permute.xlu0 %349
  %vm352 = vcmask 973824
  %v353 = vsel %vm352, %v350, 0.0
  %v354 = vlaneseq
  %v355 = vshrl.u32 %v354, 7
  %v356 = vsub.s32 0, %v355
  %v357 = vrot.slane %v61, %v356
  %v358 = vmul.f32 %v353, %v357
  %v359 = vpack.c.bf16 %v302, %v297
  %v360 = vpack.c.bf16 %v317, %v312
  %v361 = vpack.c.bf16 %v328, %v318
  %v362 = vpack.c.bf16 %v348, %v338
  %v363 = vpack.c.bf16 %v358, %v358
  %vm364 = vcmask 588800
  %v366 = vsel %vm364, %v71, 0
  %v369 = vsel %vm73, %v363, 0
  %371 = vmatprep.subr.bf16.mxu0 0
  %372 = vmatpush1.bf16.msra.mxu0 0
  %373 = vmatprep.subr.bf16.mxu0 0
  %374 = vmatpush1.bf16.msra.mxu0 0
  %375 = vmatprep.subr.bf16.mxu0 0
  %376 = vmatpush1.bf16.msra.mxu0 0
  %377 = vmatprep.subr.bf16.mxu0 0
  %378 = vmatpush1.bf16.msra.mxu0 %v369
  %379 = vmatprep.subr.bf16.mxu0 0
  %380 = vmatpush1.bf16.msra.mxu0 %v362
  %381 = vmatprep.subr.bf16.mxu0 0
  %382 = vmatpush1.bf16.msra.mxu0 %v361
  %383 = vmatprep.subr.bf16.mxu0 0
  %384 = vmatpush1.bf16.msra.mxu0 %v360
  %385 = vmatprep.subr.bf16.mxu0 0
  %386 = vmatpush1.bf16.msra.mxu0 %v359
  %387 = vmatprep.subr.bf16.mxu0 0
  %388 = vmatpush2.bf16.msra.mxu0 0
  %389 = vmatprep.subr.bf16.mxu0 0
  %390 = vmatpush2.bf16.msra.mxu0 0
  %391 = vmatprep.subr.bf16.mxu0 0
  %392 = vmatpush2.bf16.msra.mxu0 0
  %393 = vmatprep.subr.bf16.mxu0 0
  %394 = vmatpush2.bf16.msra.mxu0 0
  %395 = vmatprep.subr.bf16.mxu0 0
  %396 = vmatpush2.bf16.msra.mxu0 0
  %397 = vmatprep.subr.bf16.mxu0 0
  %398 = vmatpush2.bf16.msra.mxu0 0
  %399 = vmatprep.subr.bf16.mxu0 0
  %400 = vmatpush2.bf16.msra.mxu0 0
  %401 = vmatprep.subr.bf16.mxu0 0
  %402 = vmatpush2.bf16.msra.mxu0 0
  %403 = vmatprep.mubr.bf16.mxu0 0
  %404 = vmatmul.mubr.bf16.gmra.mxu0 %v366
  %v405 = vpop.f32.mrf.mxu0
  %v406 = vadd.f32 0.0, %v405
  %v407 = vpop.f32.mrf.mxu0
  %v408 = vpop.f32.mrf.mxu0
  %v409 = vpop.f32.mrf.mxu0
  %410 = vdwg.mxu0
  %v411 = vpack.c.bf16 %v133, %v133
  %vm412 = vcmask 31744
  %v414 = vsel %vm412, %v72, 0
  %v417 = vsel %vm217, %v411, 0
  %419 = vmatprep.subr.bf16.mxu0 0
  %420 = vmatpush1.bf16.msra.mxu0 0
  %421 = vmatprep.subr.bf16.mxu0 0
  %422 = vmatpush1.bf16.msra.mxu0 0
  %423 = vmatprep.subr.bf16.mxu0 0
  %424 = vmatpush1.bf16.msra.mxu0 0
  %425 = vmatprep.subr.bf16.mxu0 0
  %426 = vmatpush1.bf16.msra.mxu0 0
  %427 = vmatprep.subr.bf16.mxu0 0
  %428 = vmatpush1.bf16.msra.mxu0 0
  %429 = vmatprep.subr.bf16.mxu0 0
  %430 = vmatpush1.bf16.msra.mxu0 0
  %431 = vmatprep.subr.bf16.mxu0 0
  %432 = vmatpush1.bf16.msra.mxu0 0
  %433 = vmatprep.subr.bf16.mxu0 0
  %434 = vmatpush1.bf16.msra.mxu0 %v417
  %435 = vmatprep.subr.bf16.mxu0 0
  %436 = vmatpush2.bf16.msra.mxu0 0
  %437 = vmatprep.subr.bf16.mxu0 0
  %438 = vmatpush2.bf16.msra.mxu0 0
  %439 = vmatprep.subr.bf16.mxu0 0
  %440 = vmatpush2.bf16.msra.mxu0 0
  %441 = vmatprep.subr.bf16.mxu0 0
  %442 = vmatpush2.bf16.msra.mxu0 0
  %443 = vmatprep.subr.bf16.mxu0 0
  %444 = vmatpush2.bf16.msra.mxu0 0
  %445 = vmatprep.subr.bf16.mxu0 0
  %446 = vmatpush2.bf16.msra.mxu0 0
  %447 = vmatprep.subr.bf16.mxu0 0
  %448 = vmatpush2.bf16.msra.mxu0 0
  %449 = vmatprep.subr.bf16.mxu0 0
  %450 = vmatpush2.bf16.msra.mxu0 0
  %451 = vmatprep.mubr.bf16.mxu0 0
  %452 = vmatmul.mubr.bf16.gmra.mxu0 %v414
  %v453 = vpop.f32.mrf.mxu0
  %v454 = vadd.f32 %v406, %v453
  %v455 = vpop.f32.mrf.mxu0
  %v456 = vpop.f32.mrf.mxu0
  %v457 = vpop.f32.mrf.mxu0
  %458 = vdwg.mxu0
  %v459 = vld [vmem:[%s12] sm:$0xff]
  %v460 = vld [vmem:[%s13] sm:$0xff]
  %v461 = vld [vmem:[%s14] sm:$0xf]
  %v462 = vld [vmem:[%s15] sm:$0xff]
  %v463 = vld [vmem:[%s16] sm:$0xff]
  %v464 = vld [vmem:[%s17] sm:$0xf]
  %465 = vadd.xlane.f32.xlu0 %v454
  %v466 = vpop.xlane.xlu0 %465
  %v467 = vadd.f32 %v466, 0.0
  %v468 = vmul.f32 %v454, %v454
  %469 = vadd.xlane.f32.xlu0 %v468
  %v470 = vpop.xlane.xlu0 %469
  %v471 = vadd.f32 %v470, 0.0
  %v472 = vmul.f32 %v467, %v268
  %v473 = vmul.f32 %v471, %v268
  %v474 = vmul.f32 %v472, %v472
  %v475 = vsub.f32 %v473, %v474
  %v476 = vmax.f32 %v475, 0.0
  %v477 = vadd.f32 %v476, 1e-05
  %v478 = vrsqrt.pop %v477
  %v479 = vmul.f32 %v478, %v459
  %v480 = vmul.f32 %v472, %v479
  %v481 = vsub.f32 %v460, %v480
  %483 = vset.pattern.permute.xlu0 0
  %484 = vperm.xlu0 %483, %v479
  %v485 = vpop.permute.xlu0 %484
  %v487 = vmul.f32 %v454, %v485
  %489 = vset.pattern.permute.xlu0 0
  %490 = vperm.xlu0 %489, %v481
  %v491 = vpop.permute.xlu0 %490
  %v493 = vadd.f32 %v487, %v491
  %v494 = vmax.f32 %v493, 0.0
  %496 = vrot.lane.b32.xlu0 %v494, 9
  %v497 = vpop.permute.xlu0 %496
  %v499 = vsel %vm147, 0.0, %v497
  %v500 = vmul.f32 %v499, %v152
  %501 = vrot.lane.b32.xlu0 %v494, 8
  %v502 = vpop.permute.xlu0 %501
  %v504 = vsel %vm158, 0.0, %v502
  %v505 = vmul.f32 %v504, %v163
  %506 = vrot.lane.b32.xlu0 %v494, 7
  %v507 = vpop.permute.xlu0 %506
  %v509 = vsel %vm306, 0.0, %v507
  %v510 = vmul.f32 %v509, %v311
  %511 = vrot.lane.b32.xlu0 %v494, 1
  %v512 = vpop.permute.xlu0 %511
  %v514 = vsel %vm174, 0.0, %v512
  %v515 = vmul.f32 %v514, %v179
  %v516 = vmul.f32 %v494, %v184
  %517 = vrot.lane.b32.xlu0 %v494, 127
  %v518 = vpop.permute.xlu0 %517
  %v520 = vsel %vm322, %v518, 0.0
  %v521 = vmul.f32 %v520, %v327
  %522 = vrot.lane.b32.xlu0 %v494, 121
  %v523 = vpop.permute.xlu0 %522
  %v525 = vsel %vm332, %v523, 0.0
  %v526 = vmul.f32 %v525, %v337
  %527 = vrot.lane.b32.xlu0 %v494, 120
  %v528 = vpop.permute.xlu0 %527
  %v530 = vsel %vm342, %v528, 0.0
  %v531 = vmul.f32 %v530, %v347
  %532 = vrot.lane.b32.xlu0 %v494, 119
  %v533 = vpop.permute.xlu0 %532
  %v535 = vsel %vm352, %v533, 0.0
  %v536 = vmul.f32 %v535, %v357
  %v537 = vpack.c.bf16 %v505, %v500
  %v538 = vpack.c.bf16 %v515, %v510
  %v539 = vpack.c.bf16 %v521, %v516
  %v540 = vpack.c.bf16 %v531, %v526
  %v541 = vpack.c.bf16 %v536, %v536
  %v543 = vsel %vm364, %v461, 0
  %v546 = vsel %vm73, %v541, 0
  %548 = vmatprep.subr.bf16.mxu0 0
  %549 = vmatpush1.bf16.msra.mxu0 0
  %550 = vmatprep.subr.bf16.mxu0 0
  %551 = vmatpush1.bf16.msra.mxu0 0
  %552 = vmatprep.subr.bf16.mxu0 0
  %553 = vmatpush1.bf16.msra.mxu0 0
  %554 = vmatprep.subr.bf16.mxu0 0
  %555 = vmatpush1.bf16.msra.mxu0 %v546
  %556 = vmatprep.subr.bf16.mxu0 0
  %557 = vmatpush1.bf16.msra.mxu0 %v540
  %558 = vmatprep.subr.bf16.mxu0 0
  %559 = vmatpush1.bf16.msra.mxu0 %v539
  %560 = vmatprep.subr.bf16.mxu0 0
  %561 = vmatpush1.bf16.msra.mxu0 %v538
  %562 = vmatprep.subr.bf16.mxu0 0
  %563 = vmatpush1.bf16.msra.mxu0 %v537
  %564 = vmatprep.subr.bf16.mxu0 0
  %565 = vmatpush2.bf16.msra.mxu0 0
  %566 = vmatprep.subr.bf16.mxu0 0
  %567 = vmatpush2.bf16.msra.mxu0 0
  %568 = vmatprep.subr.bf16.mxu0 0
  %569 = vmatpush2.bf16.msra.mxu0 0
  %570 = vmatprep.subr.bf16.mxu0 0
  %571 = vmatpush2.bf16.msra.mxu0 0
  %572 = vmatprep.subr.bf16.mxu0 0
  %573 = vmatpush2.bf16.msra.mxu0 0
  %574 = vmatprep.subr.bf16.mxu0 0
  %575 = vmatpush2.bf16.msra.mxu0 0
  %576 = vmatprep.subr.bf16.mxu0 0
  %577 = vmatpush2.bf16.msra.mxu0 0
  %578 = vmatprep.subr.bf16.mxu0 0
  %579 = vmatpush2.bf16.msra.mxu0 0
  %580 = vmatprep.mubr.bf16.mxu0 0
  %581 = vmatmul.mubr.bf16.gmra.mxu0 %v543
  %v582 = vpop.f32.mrf.mxu0
  %v583 = vadd.f32 0.0, %v582
  %v584 = vpop.f32.mrf.mxu0
  %v585 = vpop.f32.mrf.mxu0
  %v586 = vpop.f32.mrf.mxu0
  %587 = vdwg.mxu0
  %588 = vadd.xlane.f32.xlu0 %v583
  %v589 = vpop.xlane.xlu0 %588
  %v590 = vadd.f32 %v589, 0.0
  %v591 = vmul.f32 %v583, %v583
  %592 = vadd.xlane.f32.xlu0 %v591
  %v593 = vpop.xlane.xlu0 %592
  %v594 = vadd.f32 %v593, 0.0
  %v595 = vmul.f32 %v590, %v268
  %v596 = vmul.f32 %v594, %v268
  %v597 = vmul.f32 %v595, %v595
  %v598 = vsub.f32 %v596, %v597
  %v599 = vmax.f32 %v598, 0.0
  %v600 = vadd.f32 %v599, 1e-05
  %v601 = vrsqrt.pop %v600
  %v602 = vmul.f32 %v601, %v462
  %v603 = vmul.f32 %v595, %v602
  %v604 = vsub.f32 %v463, %v603
  %606 = vset.pattern.permute.xlu0 0
  %607 = vperm.xlu0 %606, %v602
  %v608 = vpop.permute.xlu0 %607
  %v610 = vmul.f32 %v583, %v608
  %612 = vset.pattern.permute.xlu0 0
  %613 = vperm.xlu0 %612, %v604
  %v614 = vpop.permute.xlu0 %613
  %v616 = vadd.f32 %v610, %v614
  %v617 = vmax.f32 %v616, 0.0
  %619 = vrot.lane.b32.xlu0 %v617, 9
  %v620 = vpop.permute.xlu0 %619
  %v622 = vsel %vm147, 0.0, %v620
  %v623 = vmul.f32 %v622, %v152
  %624 = vrot.lane.b32.xlu0 %v617, 8
  %v625 = vpop.permute.xlu0 %624
  %v627 = vsel %vm158, 0.0, %v625
  %v628 = vmul.f32 %v627, %v163
  %629 = vrot.lane.b32.xlu0 %v617, 7
  %v630 = vpop.permute.xlu0 %629
  %v632 = vsel %vm306, 0.0, %v630
  %v633 = vmul.f32 %v632, %v311
  %634 = vrot.lane.b32.xlu0 %v617, 1
  %v635 = vpop.permute.xlu0 %634
  %v637 = vsel %vm174, 0.0, %v635
  %v638 = vmul.f32 %v637, %v179
  %v639 = vmul.f32 %v617, %v184
  %640 = vrot.lane.b32.xlu0 %v617, 127
  %v641 = vpop.permute.xlu0 %640
  %v643 = vsel %vm322, %v641, 0.0
  %v644 = vmul.f32 %v643, %v327
  %645 = vrot.lane.b32.xlu0 %v617, 121
  %v646 = vpop.permute.xlu0 %645
  %v648 = vsel %vm332, %v646, 0.0
  %v649 = vmul.f32 %v648, %v337
  %650 = vrot.lane.b32.xlu0 %v617, 120
  %v651 = vpop.permute.xlu0 %650
  %v653 = vsel %vm342, %v651, 0.0
  %v654 = vmul.f32 %v653, %v347
  %655 = vrot.lane.b32.xlu0 %v617, 119
  %v656 = vpop.permute.xlu0 %655
  %v658 = vsel %vm352, %v656, 0.0
  %v659 = vmul.f32 %v658, %v357
  %v660 = vpack.c.bf16 %v628, %v623
  %v661 = vpack.c.bf16 %v638, %v633
  %v662 = vpack.c.bf16 %v644, %v639
  %v663 = vpack.c.bf16 %v654, %v649
  %v664 = vpack.c.bf16 %v659, %v659
  %v666 = vsel %vm364, %v464, 0
  %v669 = vsel %vm73, %v664, 0
  %671 = vmatprep.subr.bf16.mxu0 0
  %672 = vmatpush1.bf16.msra.mxu0 0
  %673 = vmatprep.subr.bf16.mxu0 0
  %674 = vmatpush1.bf16.msra.mxu0 0
  %675 = vmatprep.subr.bf16.mxu0 0
  %676 = vmatpush1.bf16.msra.mxu0 0
  %677 = vmatprep.subr.bf16.mxu0 0
  %678 = vmatpush1.bf16.msra.mxu0 %v669
  %679 = vmatprep.subr.bf16.mxu0 0
  %680 = vmatpush1.bf16.msra.mxu0 %v663
  %681 = vmatprep.subr.bf16.mxu0 0
  %682 = vmatpush1.bf16.msra.mxu0 %v662
  %683 = vmatprep.subr.bf16.mxu0 0
  %684 = vmatpush1.bf16.msra.mxu0 %v661
  %685 = vmatprep.subr.bf16.mxu0 0
  %686 = vmatpush1.bf16.msra.mxu0 %v660
  %687 = vmatprep.subr.bf16.mxu0 0
  %688 = vmatpush2.bf16.msra.mxu0 0
  %689 = vmatprep.subr.bf16.mxu0 0
  %690 = vmatpush2.bf16.msra.mxu0 0
  %691 = vmatprep.subr.bf16.mxu0 0
  %692 = vmatpush2.bf16.msra.mxu0 0
  %693 = vmatprep.subr.bf16.mxu0 0
  %694 = vmatpush2.bf16.msra.mxu0 0
  %695 = vmatprep.subr.bf16.mxu0 0
  %696 = vmatpush2.bf16.msra.mxu0 0
  %697 = vmatprep.subr.bf16.mxu0 0
  %698 = vmatpush2.bf16.msra.mxu0 0
  %699 = vmatprep.subr.bf16.mxu0 0
  %700 = vmatpush2.bf16.msra.mxu0 0
  %701 = vmatprep.subr.bf16.mxu0 0
  %702 = vmatpush2.bf16.msra.mxu0 0
  %703 = vmatprep.mubr.bf16.mxu0 0
  %704 = vmatmul.mubr.bf16.gmra.mxu0 %v666
  %v705 = vpop.f32.mrf.mxu0
  %v706 = vadd.f32 0.0, %v705
  %v707 = vpop.f32.mrf.mxu0
  %v708 = vpop.f32.mrf.mxu0
  %v709 = vpop.f32.mrf.mxu0
  %710 = vdwg.mxu0
  %v711 = vadd.f32 %v454, %v706
  %712 = vst [vmem:[%s18] sm:$0xff] %v711
  // Predicated region
  $region74: #{_lambda_.1} parent=0 // pred_check
    _
  $region75: #{_lambda_.1} parent=0 // pred_check_branch
    %714 = sbr.rel (0) target = $region77
  $region76: #{_lambda_.1} parent=0 // pred_region
    _
  $region77: #{_lambda_.1} parent=0 // pred_fallthru
    _
  // Predicated region
  $region78: #{_lambda_.1} parent=0 // pred_check
    _
  $region79: #{_lambda_.1} parent=0 // pred_check_branch
    %716 = sbr.rel (0) target = $region81
  $region80: #{_lambda_.1} parent=0 // pred_region
    _
  $region81: #{_lambda_.1} parent=0 // pred_fallthru
    _

</llo_original>
